<compile_context>
chip_gen: v7x
topology: tpu7x:2x2x1
jax: 0.10.0
libtpu: 0.0.40
codegen_flags: <defaults>
</compile_context>

<pallas_src>
import functools

import numpy as np
import jax
import jax.numpy as jnp
from jax import lax
from jax.experimental import pallas as pl
from jax.experimental.pallas import tpu as pltpu

# bf16 on v6e/v7x for native MXU throughput (f32 accumulation is kept via
# preferred_element_type); f32 default so the correctness check below stays tight.
MATMUL_DTYPE = jnp.float32


# ----------------------------- fused Pallas kernel ------------------------------ #

def _gn_silu(xf, gamma, beta, ohf_ref, ohb_ref, eps):
    """GroupNorm (affine) + SiLU on an (H, W*C) lane-folded tile.

    Per-group mean / E[x^2] come from one sublane reduction + tiny one-hot matmuls
    (the 1/count factor is pre-folded into ohf by the wrapper); broadcasting back to
    lanes is another one-hot matmul.  No cross-lane scalar reductions.
    """
    s1 = jnp.sum(xf, axis=0, keepdims=True)                       # (1, W*C)
    s2 = jnp.sum(xf * xf, axis=0, keepdims=True)                  # (1, W*C)
    gmean = jnp.dot(s1, ohf_ref[...], preferred_element_type=jnp.float32)   # (1, G)
    gex2 = jnp.dot(s2, ohf_ref[...], preferred_element_type=jnp.float32)    # (1, G)
    gvar = jnp.maximum(gex2 - gmean * gmean, 0.0)                 # f32; guard cancellation
    grstd = lax.rsqrt(gvar + eps)                                 # (1, G)
    mean_l = jnp.dot(gmean, ohb_ref[...], preferred_element_type=jnp.float32)  # (1, W*C)
    rstd_l = jnp.dot(grstd, ohb_ref[...], preferred_element_type=jnp.float32)  # (1, W*C)
    scale = gamma * rstd_l
    shift = beta - mean_l * scale
    y = xf * scale + shift
    return y * jax.nn.sigmoid(y)                                  # SiLU


def _conv3x3_rows(pad_ref, tw_ref, H):
    """3x3 'SAME' conv as 3 row-shifted matmuls vs Toeplitz weights (lane-dense)."""
    acc = jnp.dot(pad_ref[0:H, :].astype(MATMUL_DTYPE), tw_ref[0],
                  preferred_element_type=jnp.float32)
    acc = acc + jnp.dot(pad_ref[1:H + 1, :].astype(MATMUL_DTYPE), tw_ref[1],
                        preferred_element_type=jnp.float32)
    acc = acc + jnp.dot(pad_ref[2:H + 2, :].astype(MATMUL_DTYPE), tw_ref[2],
                        preferred_element_type=jnp.float32)
    return acc                                                    # (H, W*Cout) f32


def residual_block_kernel(x_ref, temb_ref,
                          g1_ref, be1_ref, oh1f_ref, oh1b_ref, tw1_ref, b1_ref,
                          g2_ref, be2_ref, oh2f_ref, oh2b_ref, tw2_ref, b2_ref,
                          *rest, eps, has_res_conv):
    """Fully fused ResidualBlock forward for one batch sample (lane-folded tiles)."""
    if has_res_conv:
        wres_ref, bres_ref, o_ref, pad1, pad2 = rest
    else:
        o_ref, pad1, pad2 = rest

    H = x_ref.shape[1]
    xf = x_ref[0].astype(jnp.float32)                             # (H, W*Cin)
    temb = temb_ref[0]                                            # (1, W*Cout)

    # --- block1: GroupNorm -> SiLU -> Conv3x3 (+bias), then + time embedding ---
    h1 = _gn_silu(xf, g1_ref[...], be1_ref[...], oh1f_ref, oh1b_ref, eps)
    zr1 = jnp.zeros((1, pad1.shape[1]), jnp.float32)
    pad1[0:1, :] = zr1                # zero halo rows only (cheap; megacore-safe)
    pad1[H + 1:H + 2, :] = zr1
    pad1[1:H + 1, :] = h1             # interior: one lane-dense store
    h = _conv3x3_rows(pad1, tw1_ref, H) + b1_ref[...] + temb      # (H, W*Cout)

    # --- block2: GroupNorm -> SiLU -> Dropout(identity) -> Conv3x3 (+bias) ---
    # TODO(synk): nn.Dropout treated as eval-mode identity (no PyTorch RNG state).
    h2 = _gn_silu(h, g2_ref[...], be2_ref[...], oh2f_ref, oh2b_ref, eps)
    zr2 = jnp.zeros((1, pad2.shape[1]), jnp.float32)
    pad2[0:1, :] = zr2
    pad2[H + 1:H + 2, :] = zr2
    pad2[1:H + 1, :] = h2
    out = _conv3x3_rows(pad2, tw2_ref, H) + b2_ref[...]           # (H, W*Cout)

    # --- residual path: 1x1 conv (block-diag matmul) or direct add ---
    if has_res_conv:
        res = jnp.dot(xf.astype(MATMUL_DTYPE), wres_ref[...],
                      preferred_element_type=jnp.float32) + bres_ref[...]
    else:
        res = xf                                                  # Cin == Cout

    o_ref[0] = (out + res).astype(o_ref.dtype)                    # lane-dense store


# ----------------------------- wrapper helpers ----------------------------------- #

def _tile_lanes(v, W):
    """(1, C) per-channel vector -> (1, W*C) lane-folded vector (index w*C+c -> v[c])."""
    return jnp.tile(jnp.asarray(v, jnp.float32).reshape(1, -1), (1, W))


def _build_row_toeplitz(w9, ci, co, W):
    """(9, ci, co) 3x3 tap weights -> (3, W*ci, W*co) row-shift matmul matrices.

    T[ky][w'*ci+c_i, w*co+c_o] = w9[3*ky + (w'-w+1), c_i, c_o] when 0 <= w'-w+1 <= 2,
    else 0 -- the kx taps and the W-direction zero padding are folded in.
    """
    src_w = np.arange(W * ci) // ci
    src_c = np.arange(W * ci) % ci
    dst_w = np.arange(W * co) // co
    dst_c = np.arange(W * co) % co
    kx = src_w[:, None] - dst_w[None, :] + 1
    valid = (kx >= 0) & (kx <= 2)
    kxc = np.clip(kx, 0, 2)
    mats = []
    for ky in range(3):
        taps = w9[3 * ky + kxc, src_c[:, None], dst_c[None, :]]   # gather (W*ci, W*co)
        mats.append(jnp.where(valid, taps, 0.0))
    return jnp.stack(mats, axis=0)


def _block_diag_1x1(w, ci, co, W):
    """(ci, co) 1x1-conv weight -> (W*ci, W*co) block-diagonal matrix."""
    src_w = np.arange(W * ci) // ci
    src_c = np.arange(W * ci) % ci
    dst_w = np.arange(W * co) // co
    dst_c = np.arange(W * co) % co
    same = src_w[:, None] == dst_w[None, :]
    return jnp.where(same, w[src_c[:, None], dst_c[None, :]], 0.0)


def _group_onehots(C, W, H, groups):
    """Lane->group reduce matrix (with 1/count folded in) and group->lane scatter."""
    cpg = C // groups
    lane_g = (np.arange(W * C) % C) // cpg
    ohf = (lane_g[:, None] == np.arange(groups)[None, :]).astype(np.float32)
    ohf = ohf / float(H * W * cpg)
    ohb = (np.arange(groups)[:, None] == lane_g[None, :]).astype(np.float32)
    return jnp.asarray(ohf), jnp.asarray(ohb)


# ----------------------------- forward wrapper ------------------------------------ #

def residual_block_forward(x_nchw, t, params, in_channels, out_channels, eps=1e-5):
    """Pallas forward matching ResidualBlock.forward (dropout in eval mode)."""
    N, Cin, H, W = x_nchw.shape
    Cout = out_channels
    groups1, groups2 = min(4, in_channels), min(4, out_channels)
    has_res = in_channels != out_channels

    # NCHW -> lane-folded (N, H, W*Cin).
    x = jnp.transpose(x_nchw, (0, 2, 3, 1)).reshape(N, H, W * Cin).astype(jnp.float32)

    # Time embedding once per sample in the wrapper (was recomputed per grid step).
    t32 = t.astype(jnp.float32)
    temb = (t32 * jax.nn.sigmoid(t32)) @ params["wt"] + params["bt"].reshape(1, -1)
    temb = jnp.tile(temb, (1, W)).reshape(N, 1, W * Cout)          # (N, 1, W*Cout)

    g1, be1 = _tile_lanes(params["gn1_gamma"], W), _tile_lanes(params["gn1_beta"], W)
    g2, be2 = _tile_lanes(params["gn2_gamma"], W), _tile_lanes(params["gn2_beta"], W)
    b1, b2 = _tile_lanes(params["b1"], W), _tile_lanes(params["b2"], W)
    oh1f, oh1b = _group_onehots(Cin, W, H, groups1)
    oh2f, oh2b = _group_onehots(Cout, W, H, groups2)
    tw1 = _build_row_toeplitz(params["w1"], Cin, Cout, W).astype(MATMUL_DTYPE)
    tw2 = _build_row_toeplitz(params["w2"], Cout, Cout, W).astype(MATMUL_DTYPE)

    def rep_spec(a):                                               # replicated param block
        zeros = (0,) * a.ndim
        return pl.BlockSpec(a.shape, lambda n, _z=zeros: _z)

    inputs = [x, temb, g1, be1, oh1f, oh1b, tw1, b1, g2, be2, oh2f, oh2b, tw2, b2]
    in_specs = [pl.BlockSpec((1, H, W * Cin), lambda n: (n, 0, 0)),     # x (per sample)
                pl.BlockSpec((1, 1, W * Cout), lambda n: (n, 0, 0)),    # temb (per sample)
                rep_spec(g1), rep_spec(be1), rep_spec(oh1f), rep_spec(oh1b),
                rep_spec(tw1), rep_spec(b1),
                rep_spec(g2), rep_spec(be2), rep_spec(oh2f), rep_spec(oh2b),
                rep_spec(tw2), rep_spec(b2)]
    if has_res:
        wres = _block_diag_1x1(params["w_res"], Cin, Cout, W).astype(MATMUL_DTYPE)
        bres = _tile_lanes(params["b_res"], W)
        inputs += [wres, bres]
        in_specs += [rep_spec(wres), rep_spec(bres)]

    kernel = functools.partial(residual_block_kernel, eps=eps, has_res_conv=has_res)

    out = pl.pallas_call(
        kernel,
        out_shape=jax.ShapeDtypeStruct((N, H, W * Cout), jnp.float32),
        grid=(N,),
        in_specs=in_specs,
        out_specs=pl.BlockSpec((1, H, W * Cout), lambda n: (n, 0, 0)),
        scratch_shapes=[pltpu.VMEM((H + 2, W * Cin), jnp.float32),   # conv1 halo rows
                        pltpu.VMEM((H + 2, W * Cout), jnp.float32)], # conv2 halo rows
        compiler_params=pltpu.CompilerParams(
            # Batch-parallel: v7x (2 TCs) gets one sample per core at N=2;
            # neutral on v5e/v6e (1 TC).
            dimension_semantics=("parallel",),
            vmem_limit_bytes=32 * 1024 * 1024),
    )(*inputs)

    return jnp.transpose(out.reshape(N, H, W, Cout), (0, 3, 1, 2))   # -> NCHW


# ----------------------------- reference (plain JAX) ------------------------------ #

def _ref_gn_silu(x, gamma, beta, groups, eps=1e-5):
    N, H, W, C = x.shape
    xg = x.reshape(N, H, W, groups, C // groups)
    mu = xg.mean(axis=(1, 2, 4), keepdims=True)
    var = ((xg - mu) ** 2).mean(axis=(1, 2, 4), keepdims=True)
    xn = ((xg - mu) / jnp.sqrt(var + eps)).reshape(N, H, W, C)
    y = xn * gamma.reshape(1, 1, 1, C) + beta.reshape(1, 1, 1, C)
    return y * jax.nn.sigmoid(y)


def _ref_conv3x3(x, w9, b):
    Cin, Cout = w9.shape[1], w9.shape[2]
    w = w9.reshape(3, 3, Cin, Cout)
    y = lax.conv_general_dilated(x, w, (1, 1), "SAME",
                                 dimension_numbers=("NHWC", "HWIO", "NHWC"))
    return y + b.reshape(1, 1, 1, Cout)


def residual_block_reference(x_nchw, t, params, in_channels, out_channels):
    x = jnp.transpose(x_nchw, (0, 2, 3, 1)).astype(jnp.float32)
    h = _ref_gn_silu(x, params["gn1_gamma"], params["gn1_beta"], min(4, in_channels))
    h = _ref_conv3x3(h, params["w1"], params["b1"])
    ts = t * jax.nn.sigmoid(t)
    temb = ts @ params["wt"] + params["bt"].reshape(1, -1)
    h = h + temb[:, None, None, :]
    h2 = _ref_gn_silu(h, params["gn2_gamma"], params["gn2_beta"], min(4, out_channels))
    h2 = _ref_conv3x3(h2, params["w2"], params["b2"])
    res = x @ params["w_res"] + params["b_res"].reshape(1, 1, 1, -1)
    return jnp.transpose(h2 + res, (0, 3, 1, 2))


# ----------------------------- main ------------------------------------------------ #

if __name__ == "__main__":
    N, Cin, Cout, H, W, Tdim = 2, 4, 8, 16, 16, 32

    key = jax.random.PRNGKey(0)
    ks = jax.random.split(key, 16)

    def rnd(k, shape, scale=0.1):
        return scale * jax.random.normal(k, shape, jnp.float32)

    params = {
        # GroupNorm affine params (PyTorch weight/bias (C,)) stored as (1, C)
        "gn1_gamma": 1.0 + rnd(ks[0], (1, Cin)),
        "gn1_beta":  rnd(ks[1], (1, Cin)),
        "gn2_gamma": 1.0 + rnd(ks[2], (1, Cout)),
        "gn2_beta":  rnd(ks[3], (1, Cout)),
        # Conv2d 3x3 weights (PyTorch (Cout,Cin,3,3)) stored as (9, Cin, Cout); bias (1, Cout)
        "w1": rnd(ks[4], (9, Cin, Cout)),
        "b1": rnd(ks[5], (1, Cout)),
        "w2": rnd(ks[6], (9, Cout, Cout)),
        "b2": rnd(ks[7], (1, Cout)),
        # time_mlp Linear (PyTorch (Cout, Tdim)) stored transposed as (Tdim, Cout); bias (1, Cout)
        "wt": rnd(ks[8], (Tdim, Cout)),
        "bt": rnd(ks[9], (1, Cout)),
        # residual 1x1 conv (PyTorch (Cout, Cin, 1, 1)) stored as (Cin, Cout); bias (1, Cout)
        "w_res": rnd(ks[10], (Cin, Cout)),
        "b_res": rnd(ks[11], (1, Cout)),
    }

    x = jax.random.normal(ks[12], (N, Cin, H, W), jnp.float32)   # NCHW, like PyTorch
    t = jax.random.normal(ks[13], (N, Tdim), jnp.float32)

    out = residual_block_forward(x, t, params, Cin, Cout)
    out = jax.block_until_ready(out)

    ref = jax.block_until_ready(residual_block_reference(x, t, params, Cin, Cout))
    assert out.shape == (N, Cout, H, W)
    assert jnp.allclose(out, ref, atol=1e-3, rtol=1e-3), float(jnp.max(jnp.abs(out - ref)))

    print("KERNEL_OK")
</pallas_src>

<mosaic_0001>
module attributes {stable_mosaic.version = 11 : i64} {
  func.func @residual_block_kernel(%arg0: i32, %arg1: memref<1x16x64xf32, #tpu.memory_space<vmem>>, %arg2: memref<1x1x128xf32, #tpu.memory_space<vmem>>, %arg3: memref<1x64xf32, #tpu.memory_space<vmem>>, %arg4: memref<1x64xf32, #tpu.memory_space<vmem>>, %arg5: memref<64x4xf32, #tpu.memory_space<vmem>>, %arg6: memref<4x64xf32, #tpu.memory_space<vmem>>, %arg7: memref<3x64x128xf32, #tpu.memory_space<vmem>>, %arg8: memref<1x128xf32, #tpu.memory_space<vmem>>, %arg9: memref<1x128xf32, #tpu.memory_space<vmem>>, %arg10: memref<1x128xf32, #tpu.memory_space<vmem>>, %arg11: memref<128x4xf32, #tpu.memory_space<vmem>>, %arg12: memref<4x128xf32, #tpu.memory_space<vmem>>, %arg13: memref<3x128x128xf32, #tpu.memory_space<vmem>>, %arg14: memref<1x128xf32, #tpu.memory_space<vmem>>, %arg15: memref<64x128xf32, #tpu.memory_space<vmem>>, %arg16: memref<1x128xf32, #tpu.memory_space<vmem>>, %arg17: memref<1x16x128xf32, #tpu.memory_space<vmem>>, %arg18: memref<18x64xf32, #tpu.memory_space<vmem>>, %arg19: memref<18x128xf32, #tpu.memory_space<vmem>>) attributes {dimension_semantics = [#tpu.dimension_semantics<parallel>], iteration_bounds = array<i64: 2>, scalar_prefetch = 0 : i64, scratch_operands = 2 : i64, tpu.core_type = #tpu.core_type<tc>, window_params = [{transform_indices = @transform_0, window_bounds = array<i64: 1, 16, 64>}, {transform_indices = @transform_1, window_bounds = array<i64: 1, 1, 128>}, {pipeline_mode = #tpu.pipeline_mode<synchronous>, transform_indices = @transform_2, window_bounds = array<i64: 1, 64>}, {pipeline_mode = #tpu.pipeline_mode<synchronous>, transform_indices = @transform_3, window_bounds = array<i64: 1, 64>}, {pipeline_mode = #tpu.pipeline_mode<synchronous>, transform_indices = @transform_4, window_bounds = array<i64: 64, 4>}, {pipeline_mode = #tpu.pipeline_mode<synchronous>, transform_indices = @transform_5, window_bounds = array<i64: 4, 64>}, {pipeline_mode = #tpu.pipeline_mode<synchronous>, transform_indices = @transform_6, window_bounds = array<i64: 3, 64, 128>}, {pipeline_mode = #tpu.pipeline_mode<synchronous>, transform_indices = @transform_7, window_bounds = array<i64: 1, 128>}, {pipeline_mode = #tpu.pipeline_mode<synchronous>, transform_indices = @transform_8, window_bounds = array<i64: 1, 128>}, {pipeline_mode = #tpu.pipeline_mode<synchronous>, transform_indices = @transform_9, window_bounds = array<i64: 1, 128>}, {pipeline_mode = #tpu.pipeline_mode<synchronous>, transform_indices = @transform_10, window_bounds = array<i64: 128, 4>}, {pipeline_mode = #tpu.pipeline_mode<synchronous>, transform_indices = @transform_11, window_bounds = array<i64: 4, 128>}, {pipeline_mode = #tpu.pipeline_mode<synchronous>, transform_indices = @transform_12, window_bounds = array<i64: 3, 128, 128>}, {pipeline_mode = #tpu.pipeline_mode<synchronous>, transform_indices = @transform_13, window_bounds = array<i64: 1, 128>}, {pipeline_mode = #tpu.pipeline_mode<synchronous>, transform_indices = @transform_14, window_bounds = array<i64: 64, 128>}, {pipeline_mode = #tpu.pipeline_mode<synchronous>, transform_indices = @transform_15, window_bounds = array<i64: 1, 128>}, {transform_indices = @transform_16, window_bounds = array<i64: 1, 16, 128>}]} {
    %c0 = arith.constant 0 : index
    %c0_0 = arith.constant 0 : index
    %c0_1 = arith.constant 0 : index
    %0 = vector.load %arg1[%c0, %c0_0, %c0_1] : memref<1x16x64xf32, #tpu.memory_space<vmem>>, vector<1x16x64xf32>
    %1 = vector.shape_cast %0 : vector<1x16x64xf32> to vector<16x64xf32>
    %c0_2 = arith.constant 0 : index
    %c0_3 = arith.constant 0 : index
    %c0_4 = arith.constant 0 : index
    %2 = vector.load %arg2[%c0_2, %c0_3, %c0_4] : memref<1x1x128xf32, #tpu.memory_space<vmem>>, vector<1x1x128xf32>
    %3 = vector.shape_cast %2 : vector<1x1x128xf32> to vector<1x128xf32>
    %c0_5 = arith.constant 0 : index
    %c0_6 = arith.constant 0 : index
    %4 = vector.load %arg3[%c0_5, %c0_6] : memref<1x64xf32, #tpu.memory_space<vmem>>, vector<1x64xf32>
    %c0_7 = arith.constant 0 : index
    %c0_8 = arith.constant 0 : index
    %5 = vector.load %arg4[%c0_7, %c0_8] : memref<1x64xf32, #tpu.memory_space<vmem>>, vector<1x64xf32>
    %cst = arith.constant dense<0.000000e+00> : vector<64xf32>
    %6 = vector.multi_reduction <add>, %1, %cst [0] : vector<16x64xf32> to vector<64xf32>
    %7 = vector.shape_cast %6 : vector<64xf32> to vector<1x64xf32>
    %8 = arith.mulf %1, %1 : vector<16x64xf32>
    %cst_9 = arith.constant dense<0.000000e+00> : vector<64xf32>
    %9 = vector.multi_reduction <add>, %8, %cst_9 [0] : vector<16x64xf32> to vector<64xf32>
    %10 = vector.shape_cast %9 : vector<64xf32> to vector<1x64xf32>
    %c0_10 = arith.constant 0 : index
    %c0_11 = arith.constant 0 : index
    %11 = vector.load %arg5[%c0_10, %c0_11] : memref<64x4xf32, #tpu.memory_space<vmem>>, vector<64x4xf32>
    %cst_12 = arith.constant dense<0.000000e+00> : vector<1x4xf32>
    %12 = tpu.matmul %7, %11, %cst_12 {dimension_numbers = #tpu.dot_dimension_numbers<[1], [0], [0], [1], [0, 0, 1, 1], [], []>} : vector<1x64xf32>, vector<64x4xf32>, vector<1x4xf32> -> vector<1x4xf32>
    %c0_13 = arith.constant 0 : index
    %c0_14 = arith.constant 0 : index
    %13 = vector.load %arg5[%c0_13, %c0_14] : memref<64x4xf32, #tpu.memory_space<vmem>>, vector<64x4xf32>
    %cst_15 = arith.constant dense<0.000000e+00> : vector<1x4xf32>
    %14 = tpu.matmul %10, %13, %cst_15 {dimension_numbers = #tpu.dot_dimension_numbers<[1], [0], [0], [1], [0, 0, 1, 1], [], []>} : vector<1x64xf32>, vector<64x4xf32>, vector<1x4xf32> -> vector<1x4xf32>
    %15 = arith.mulf %12, %12 : vector<1x4xf32>
    %16 = arith.subf %14, %15 : vector<1x4xf32>
    %cst_16 = arith.constant 0.000000e+00 : f32
    %17 = vector.broadcast %cst_16 : f32 to vector<1x4xf32>
    %18 = arith.maximumf %16, %17 : vector<1x4xf32>
    %cst_17 = arith.constant 9.99999974E-6 : f32
    %19 = vector.broadcast %cst_17 : f32 to vector<1x4xf32>
    %20 = arith.addf %18, %19 : vector<1x4xf32>
    %21 = math.rsqrt %20 : vector<1x4xf32>
    %c0_18 = arith.constant 0 : index
    %c0_19 = arith.constant 0 : index
    %22 = vector.load %arg6[%c0_18, %c0_19] : memref<4x64xf32, #tpu.memory_space<vmem>>, vector<4x64xf32>
    %cst_20 = arith.constant dense<0.000000e+00> : vector<1x64xf32>
    %23 = tpu.matmul %12, %22, %cst_20 {dimension_numbers = #tpu.dot_dimension_numbers<[1], [0], [0], [1], [0, 0, 1, 1], [], []>} : vector<1x4xf32>, vector<4x64xf32>, vector<1x64xf32> -> vector<1x64xf32>
    %c0_21 = arith.constant 0 : index
    %c0_22 = arith.constant 0 : index
    %24 = vector.load %arg6[%c0_21, %c0_22] : memref<4x64xf32, #tpu.memory_space<vmem>>, vector<4x64xf32>
    %cst_23 = arith.constant dense<0.000000e+00> : vector<1x64xf32>
    %25 = tpu.matmul %21, %24, %cst_23 {dimension_numbers = #tpu.dot_dimension_numbers<[1], [0], [0], [1], [0, 0, 1, 1], [], []>} : vector<1x4xf32>, vector<4x64xf32>, vector<1x64xf32> -> vector<1x64xf32>
    %26 = arith.mulf %4, %25 : vector<1x64xf32>
    %27 = arith.mulf %23, %26 : vector<1x64xf32>
    %28 = arith.subf %5, %27 : vector<1x64xf32>
    %29 = vector.broadcast %26 : vector<1x64xf32> to vector<16x64xf32>
    %30 = arith.mulf %1, %29 : vector<16x64xf32>
    %31 = vector.broadcast %28 : vector<1x64xf32> to vector<16x64xf32>
    %32 = arith.addf %30, %31 : vector<16x64xf32>
    %33 = arith.negf %32 : vector<16x64xf32>
    %34 = math.exp %33 : vector<16x64xf32>
    %cst_24 = arith.constant 1.000000e+00 : f32
    %35 = vector.broadcast %cst_24 : f32 to vector<16x64xf32>
    %36 = arith.addf %35, %34 : vector<16x64xf32>
    %37 = arith.divf %35, %36 : vector<16x64xf32>
    %38 = arith.mulf %32, %37 : vector<16x64xf32>
    %cst_25 = arith.constant 0.000000e+00 : f32
    %39 = vector.broadcast %cst_25 : f32 to vector<1x64xf32>
    %c0_26 = arith.constant 0 : index
    %c0_27 = arith.constant 0 : index
    %40 = vector.load %arg18[%c0_26, %c0_27] : memref<18x64xf32, #tpu.memory_space<vmem>>, vector<1x64xf32>
    tpu.vector_store %arg18[%c0_26, %c0_27], %39 {strides = array<i32>} : memref<18x64xf32, #tpu.memory_space<vmem>>, vector<1x64xf32>,
    %c17 = arith.constant 17 : index
    %c0_28 = arith.constant 0 : index
    %41 = vector.load %arg18[%c17, %c0_28] : memref<18x64xf32, #tpu.memory_space<vmem>>, vector<1x64xf32>
    tpu.vector_store %arg18[%c17, %c0_28], %39 {strides = array<i32>} : memref<18x64xf32, #tpu.memory_space<vmem>>, vector<1x64xf32>,
    %c1 = arith.constant 1 : index
    %c0_29 = arith.constant 0 : index
    %42 = vector.load %arg18[%c1, %c0_29] : memref<18x64xf32, #tpu.memory_space<vmem>>, vector<16x64xf32>
    tpu.vector_store %arg18[%c1, %c0_29], %38 {strides = array<i32>} : memref<18x64xf32, #tpu.memory_space<vmem>>, vector<16x64xf32>,
    %c0_30 = arith.constant 0 : index
    %c0_31 = arith.constant 0 : index
    %43 = vector.load %arg18[%c0_30, %c0_31] : memref<18x64xf32, #tpu.memory_space<vmem>>, vector<16x64xf32>
    %c0_32 = arith.constant 0 : index
    %c0_33 = arith.constant 0 : index
    %c0_34 = arith.constant 0 : index
    %44 = vector.load %arg7[%c0_32, %c0_33, %c0_34] : memref<3x64x128xf32, #tpu.memory_space<vmem>>, vector<1x64x128xf32>
    %45 = vector.shape_cast %44 : vector<1x64x128xf32> to vector<64x128xf32>
    %cst_35 = arith.constant dense<0.000000e+00> : vector<16x128xf32>
    %46 = tpu.matmul %43, %45, %cst_35 {dimension_numbers = #tpu.dot_dimension_numbers<[1], [0], [0], [1], [0, 0, 1, 1], [], []>} : vector<16x64xf32>, vector<64x128xf32>, vector<16x128xf32> -> vector<16x128xf32>
    %c1_36 = arith.constant 1 : index
    %c0_37 = arith.constant 0 : index
    %47 = vector.load %arg18[%c1_36, %c0_37] : memref<18x64xf32, #tpu.memory_space<vmem>>, vector<16x64xf32>
    %c1_38 = arith.constant 1 : index
    %c0_39 = arith.constant 0 : index
    %c0_40 = arith.constant 0 : index
    %48 = vector.load %arg7[%c1_38, %c0_39, %c0_40] : memref<3x64x128xf32, #tpu.memory_space<vmem>>, vector<1x64x128xf32>
    %49 = vector.shape_cast %48 : vector<1x64x128xf32> to vector<64x128xf32>
    %cst_41 = arith.constant dense<0.000000e+00> : vector<16x128xf32>
    %50 = tpu.matmul %47, %49, %cst_41 {dimension_numbers = #tpu.dot_dimension_numbers<[1], [0], [0], [1], [0, 0, 1, 1], [], []>} : vector<16x64xf32>, vector<64x128xf32>, vector<16x128xf32> -> vector<16x128xf32>
    %51 = arith.addf %46, %50 : vector<16x128xf32>
    %c2 = arith.constant 2 : index
    %c0_42 = arith.constant 0 : index
    %52 = vector.load %arg18[%c2, %c0_42] : memref<18x64xf32, #tpu.memory_space<vmem>>, vector<16x64xf32>
    %c2_43 = arith.constant 2 : index
    %c0_44 = arith.constant 0 : index
    %c0_45 = arith.constant 0 : index
    %53 = vector.load %arg7[%c2_43, %c0_44, %c0_45] : memref<3x64x128xf32, #tpu.memory_space<vmem>>, vector<1x64x128xf32>
    %54 = vector.shape_cast %53 : vector<1x64x128xf32> to vector<64x128xf32>
    %cst_46 = arith.constant dense<0.000000e+00> : vector<16x128xf32>
    %55 = tpu.matmul %52, %54, %cst_46 {dimension_numbers = #tpu.dot_dimension_numbers<[1], [0], [0], [1], [0, 0, 1, 1], [], []>} : vector<16x64xf32>, vector<64x128xf32>, vector<16x128xf32> -> vector<16x128xf32>
    %56 = arith.addf %51, %55 : vector<16x128xf32>
    %c0_47 = arith.constant 0 : index
    %c0_48 = arith.constant 0 : index
    %57 = vector.load %arg8[%c0_47, %c0_48] : memref<1x128xf32, #tpu.memory_space<vmem>>, vector<1x128xf32>
    %58 = vector.broadcast %57 : vector<1x128xf32> to vector<16x128xf32>
    %59 = arith.addf %56, %58 : vector<16x128xf32>
    %60 = vector.broadcast %3 : vector<1x128xf32> to vector<16x128xf32>
    %61 = arith.addf %59, %60 : vector<16x128xf32>
    %c0_49 = arith.constant 0 : index
    %c0_50 = arith.constant 0 : index
    %62 = vector.load %arg9[%c0_49, %c0_50] : memref<1x128xf32, #tpu.memory_space<vmem>>, vector<1x128xf32>
    %c0_51 = arith.constant 0 : index
    %c0_52 = arith.constant 0 : index
    %63 = vector.load %arg10[%c0_51, %c0_52] : memref<1x128xf32, #tpu.memory_space<vmem>>, vector<1x128xf32>
    %cst_53 = arith.constant dense<0.000000e+00> : vector<128xf32>
    %64 = vector.multi_reduction <add>, %61, %cst_53 [0] : vector<16x128xf32> to vector<128xf32>
    %65 = vector.shape_cast %64 : vector<128xf32> to vector<1x128xf32>
    %66 = arith.mulf %61, %61 : vector<16x128xf32>
    %cst_54 = arith.constant dense<0.000000e+00> : vector<128xf32>
    %67 = vector.multi_reduction <add>, %66, %cst_54 [0] : vector<16x128xf32> to vector<128xf32>
    %68 = vector.shape_cast %67 : vector<128xf32> to vector<1x128xf32>
    %c0_55 = arith.constant 0 : index
    %c0_56 = arith.constant 0 : index
    %69 = vector.load %arg11[%c0_55, %c0_56] : memref<128x4xf32, #tpu.memory_space<vmem>>, vector<128x4xf32>
    %cst_57 = arith.constant dense<0.000000e+00> : vector<1x4xf32>
    %70 = tpu.matmul %65, %69, %cst_57 {dimension_numbers = #tpu.dot_dimension_numbers<[1], [0], [0], [1], [0, 0, 1, 1], [], []>} : vector<1x128xf32>, vector<128x4xf32>, vector<1x4xf32> -> vector<1x4xf32>
    %c0_58 = arith.constant 0 : index
    %c0_59 = arith.constant 0 : index
    %71 = vector.load %arg11[%c0_58, %c0_59] : memref<128x4xf32, #tpu.memory_space<vmem>>, vector<128x4xf32>
    %cst_60 = arith.constant dense<0.000000e+00> : vector<1x4xf32>
    %72 = tpu.matmul %68, %71, %cst_60 {dimension_numbers = #tpu.dot_dimension_numbers<[1], [0], [0], [1], [0, 0, 1, 1], [], []>} : vector<1x128xf32>, vector<128x4xf32>, vector<1x4xf32> -> vector<1x4xf32>
    %73 = arith.mulf %70, %70 : vector<1x4xf32>
    %74 = arith.subf %72, %73 : vector<1x4xf32>
    %cst_61 = arith.constant 0.000000e+00 : f32
    %75 = vector.broadcast %cst_61 : f32 to vector<1x4xf32>
    %76 = arith.maximumf %74, %75 : vector<1x4xf32>
    %cst_62 = arith.constant 9.99999974E-6 : f32
    %77 = vector.broadcast %cst_62 : f32 to vector<1x4xf32>
    %78 = arith.addf %76, %77 : vector<1x4xf32>
    %79 = math.rsqrt %78 : vector<1x4xf32>
    %c0_63 = arith.constant 0 : index
    %c0_64 = arith.constant 0 : index
    %80 = vector.load %arg12[%c0_63, %c0_64] : memref<4x128xf32, #tpu.memory_space<vmem>>, vector<4x128xf32>
    %cst_65 = arith.constant dense<0.000000e+00> : vector<1x128xf32>
    %81 = tpu.matmul %70, %80, %cst_65 {dimension_numbers = #tpu.dot_dimension_numbers<[1], [0], [0], [1], [0, 0, 1, 1], [], []>} : vector<1x4xf32>, vector<4x128xf32>, vector<1x128xf32> -> vector<1x128xf32>
    %c0_66 = arith.constant 0 : index
    %c0_67 = arith.constant 0 : index
    %82 = vector.load %arg12[%c0_66, %c0_67] : memref<4x128xf32, #tpu.memory_space<vmem>>, vector<4x128xf32>
    %cst_68 = arith.constant dense<0.000000e+00> : vector<1x128xf32>
    %83 = tpu.matmul %79, %82, %cst_68 {dimension_numbers = #tpu.dot_dimension_numbers<[1], [0], [0], [1], [0, 0, 1, 1], [], []>} : vector<1x4xf32>, vector<4x128xf32>, vector<1x128xf32> -> vector<1x128xf32>
    %84 = arith.mulf %62, %83 : vector<1x128xf32>
    %85 = arith.mulf %81, %84 : vector<1x128xf32>
    %86 = arith.subf %63, %85 : vector<1x128xf32>
    %87 = vector.broadcast %84 : vector<1x128xf32> to vector<16x128xf32>
    %88 = arith.mulf %61, %87 : vector<16x128xf32>
    %89 = vector.broadcast %86 : vector<1x128xf32> to vector<16x128xf32>
    %90 = arith.addf %88, %89 : vector<16x128xf32>
    %91 = arith.negf %90 : vector<16x128xf32>
    %92 = math.exp %91 : vector<16x128xf32>
    %cst_69 = arith.constant 1.000000e+00 : f32
    %93 = vector.broadcast %cst_69 : f32 to vector<16x128xf32>
    %94 = arith.addf %93, %92 : vector<16x128xf32>
    %95 = arith.divf %93, %94 : vector<16x128xf32>
    %96 = arith.mulf %90, %95 : vector<16x128xf32>
    %cst_70 = arith.constant 0.000000e+00 : f32
    %97 = vector.broadcast %cst_70 : f32 to vector<1x128xf32>
    %c0_71 = arith.constant 0 : index
    %c0_72 = arith.constant 0 : index
    %98 = vector.load %arg19[%c0_71, %c0_72] : memref<18x128xf32, #tpu.memory_space<vmem>>, vector<1x128xf32>
    tpu.vector_store %arg19[%c0_71, %c0_72], %97 {strides = array<i32>} : memref<18x128xf32, #tpu.memory_space<vmem>>, vector<1x128xf32>,
    %c17_73 = arith.constant 17 : index
    %c0_74 = arith.constant 0 : index
    %99 = vector.load %arg19[%c17_73, %c0_74] : memref<18x128xf32, #tpu.memory_space<vmem>>, vector<1x128xf32>
    tpu.vector_store %arg19[%c17_73, %c0_74], %97 {strides = array<i32>} : memref<18x128xf32, #tpu.memory_space<vmem>>, vector<1x128xf32>,
    %c1_75 = arith.constant 1 : index
    %c0_76 = arith.constant 0 : index
    %100 = vector.load %arg19[%c1_75, %c0_76] : memref<18x128xf32, #tpu.memory_space<vmem>>, vector<16x128xf32>
    tpu.vector_store %arg19[%c1_75, %c0_76], %96 {strides = array<i32>} : memref<18x128xf32, #tpu.memory_space<vmem>>, vector<16x128xf32>,
    %c0_77 = arith.constant 0 : index
    %c0_78 = arith.constant 0 : index
    %101 = vector.load %arg19[%c0_77, %c0_78] : memref<18x128xf32, #tpu.memory_space<vmem>>, vector<16x128xf32>
    %c0_79 = arith.constant 0 : index
    %c0_80 = arith.constant 0 : index
    %c0_81 = arith.constant 0 : index
    %102 = vector.load %arg13[%c0_79, %c0_80, %c0_81] : memref<3x128x128xf32, #tpu.memory_space<vmem>>, vector<1x128x128xf32>
    %103 = vector.shape_cast %102 : vector<1x128x128xf32> to vector<128x128xf32>
    %cst_82 = arith.constant dense<0.000000e+00> : vector<16x128xf32>
    %104 = tpu.matmul %101, %103, %cst_82 {dimension_numbers = #tpu.dot_dimension_numbers<[1], [0], [0], [1], [0, 0, 1, 1], [], []>} : vector<16x128xf32>, vector<128x128xf32>, vector<16x128xf32> -> vector<16x128xf32>
    %c1_83 = arith.constant 1 : index
    %c0_84 = arith.constant 0 : index
    %105 = vector.load %arg19[%c1_83, %c0_84] : memref<18x128xf32, #tpu.memory_space<vmem>>, vector<16x128xf32>
    %c1_85 = arith.constant 1 : index
    %c0_86 = arith.constant 0 : index
    %c0_87 = arith.constant 0 : index
    %106 = vector.load %arg13[%c1_85, %c0_86, %c0_87] : memref<3x128x128xf32, #tpu.memory_space<vmem>>, vector<1x128x128xf32>
    %107 = vector.shape_cast %106 : vector<1x128x128xf32> to vector<128x128xf32>
    %cst_88 = arith.constant dense<0.000000e+00> : vector<16x128xf32>
    %108 = tpu.matmul %105, %107, %cst_88 {dimension_numbers = #tpu.dot_dimension_numbers<[1], [0], [0], [1], [0, 0, 1, 1], [], []>} : vector<16x128xf32>, vector<128x128xf32>, vector<16x128xf32> -> vector<16x128xf32>
    %109 = arith.addf %104, %108 : vector<16x128xf32>
    %c2_89 = arith.constant 2 : index
    %c0_90 = arith.constant 0 : index
    %110 = vector.load %arg19[%c2_89, %c0_90] : memref<18x128xf32, #tpu.memory_space<vmem>>, vector<16x128xf32>
    %c2_91 = arith.constant 2 : index
    %c0_92 = arith.constant 0 : index
    %c0_93 = arith.constant 0 : index
    %111 = vector.load %arg13[%c2_91, %c0_92, %c0_93] : memref<3x128x128xf32, #tpu.memory_space<vmem>>, vector<1x128x128xf32>
    %112 = vector.shape_cast %111 : vector<1x128x128xf32> to vector<128x128xf32>
    %cst_94 = arith.constant dense<0.000000e+00> : vector<16x128xf32>
    %113 = tpu.matmul %110, %112, %cst_94 {dimension_numbers = #tpu.dot_dimension_numbers<[1], [0], [0], [1], [0, 0, 1, 1], [], []>} : vector<16x128xf32>, vector<128x128xf32>, vector<16x128xf32> -> vector<16x128xf32>
    %114 = arith.addf %109, %113 : vector<16x128xf32>
    %c0_95 = arith.constant 0 : index
    %c0_96 = arith.constant 0 : index
    %115 = vector.load %arg14[%c0_95, %c0_96] : memref<1x128xf32, #tpu.memory_space<vmem>>, vector<1x128xf32>
    %116 = vector.broadcast %115 : vector<1x128xf32> to vector<16x128xf32>
    %117 = arith.addf %114, %116 : vector<16x128xf32>
    %c0_97 = arith.constant 0 : index
    %c0_98 = arith.constant 0 : index
    %118 = vector.load %arg15[%c0_97, %c0_98] : memref<64x128xf32, #tpu.memory_space<vmem>>, vector<64x128xf32>
    %cst_99 = arith.constant dense<0.000000e+00> : vector<16x128xf32>
    %119 = tpu.matmul %1, %118, %cst_99 {dimension_numbers = #tpu.dot_dimension_numbers<[1], [0], [0], [1], [0, 0, 1, 1], [], []>} : vector<16x64xf32>, vector<64x128xf32>, vector<16x128xf32> -> vector<16x128xf32>
    %c0_100 = arith.constant 0 : index
    %c0_101 = arith.constant 0 : index
    %120 = vector.load %arg16[%c0_100, %c0_101] : memref<1x128xf32, #tpu.memory_space<vmem>>, vector<1x128xf32>
    %121 = vector.broadcast %120 : vector<1x128xf32> to vector<16x128xf32>
    %122 = arith.addf %119, %121 : vector<16x128xf32>
    %123 = arith.addf %117, %122 : vector<16x128xf32>
    %c0_102 = arith.constant 0 : index
    %c0_103 = arith.constant 0 : index
    %c0_104 = arith.constant 0 : index
    %124 = vector.load %arg17[%c0_102, %c0_103, %c0_104] : memref<1x16x128xf32, #tpu.memory_space<vmem>>, vector<1x16x128xf32>
    %125 = vector.shape_cast %124 : vector<1x16x128xf32> to vector<16x128xf32>
    %126 = vector.shape_cast %123 : vector<16x128xf32> to vector<1x16x128xf32>
    tpu.vector_store %arg17[%c0_102, %c0_103, %c0_104], %126 {strides = array<i32>} : memref<1x16x128xf32, #tpu.memory_space<vmem>>, vector<1x16x128xf32>,
    return
  }
  func.func @transform_0(%arg0: i32) -> (i32, i32, i32) {
    %c0_i32 = arith.constant 0 : i32
    %c0_i32_0 = arith.constant 0 : i32
    %c0_i32_1 = arith.constant 0 : i32
    return %arg0, %c0_i32, %c0_i32_0 : i32, i32, i32
  }
  func.func @transform_1(%arg0: i32) -> (i32, i32, i32) {
    %c0_i32 = arith.constant 0 : i32
    %c0_i32_0 = arith.constant 0 : i32
    %c0_i32_1 = arith.constant 0 : i32
    return %arg0, %c0_i32, %c0_i32_0 : i32, i32, i32
  }
  func.func @transform_2(%arg0: i32) -> (i32, i32) {
    %c0_i32 = arith.constant 0 : i32
    %c0_i32_0 = arith.constant 0 : i32
    %c0_i32_1 = arith.constant 0 : i32
    return %c0_i32, %c0_i32_0 : i32, i32
  }
  func.func @transform_3(%arg0: i32) -> (i32, i32) {
    %c0_i32 = arith.constant 0 : i32
    %c0_i32_0 = arith.constant 0 : i32
    %c0_i32_1 = arith.constant 0 : i32
    return %c0_i32, %c0_i32_0 : i32, i32
  }
  func.func @transform_4(%arg0: i32) -> (i32, i32) {
    %c0_i32 = arith.constant 0 : i32
    %c0_i32_0 = arith.constant 0 : i32
    %c0_i32_1 = arith.constant 0 : i32
    return %c0_i32, %c0_i32_0 : i32, i32
  }
  func.func @transform_5(%arg0: i32) -> (i32, i32) {
    %c0_i32 = arith.constant 0 : i32
    %c0_i32_0 = arith.constant 0 : i32
    %c0_i32_1 = arith.constant 0 : i32
    return %c0_i32, %c0_i32_0 : i32, i32
  }
  func.func @transform_6(%arg0: i32) -> (i32, i32, i32) {
    %c0_i32 = arith.constant 0 : i32
    %c0_i32_0 = arith.constant 0 : i32
    %c0_i32_1 = arith.constant 0 : i32
    %c0_i32_2 = arith.constant 0 : i32
    return %c0_i32, %c0_i32_0, %c0_i32_1 : i32, i32, i32
  }
  func.func @transform_7(%arg0: i32) -> (i32, i32) {
    %c0_i32 = arith.constant 0 : i32
    %c0_i32_0 = arith.constant 0 : i32
    %c0_i32_1 = arith.constant 0 : i32
    return %c0_i32, %c0_i32_0 : i32, i32
  }
  func.func @transform_8(%arg0: i32) -> (i32, i32) {
    %c0_i32 = arith.constant 0 : i32
    %c0_i32_0 = arith.constant 0 : i32
    %c0_i32_1 = arith.constant 0 : i32
    return %c0_i32, %c0_i32_0 : i32, i32
  }
  func.func @transform_9(%arg0: i32) -> (i32, i32) {
    %c0_i32 = arith.constant 0 : i32
    %c0_i32_0 = arith.constant 0 : i32
    %c0_i32_1 = arith.constant 0 : i32
    return %c0_i32, %c0_i32_0 : i32, i32
  }
  func.func @transform_10(%arg0: i32) -> (i32, i32) {
    %c0_i32 = arith.constant 0 : i32
    %c0_i32_0 = arith.constant 0 : i32
    %c0_i32_1 = arith.constant 0 : i32
    return %c0_i32, %c0_i32_0 : i32, i32
  }
  func.func @transform_11(%arg0: i32) -> (i32, i32) {
    %c0_i32 = arith.constant 0 : i32
    %c0_i32_0 = arith.constant 0 : i32
    %c0_i32_1 = arith.constant 0 : i32
    return %c0_i32, %c0_i32_0 : i32, i32
  }
  func.func @transform_12(%arg0: i32) -> (i32, i32, i32) {
    %c0_i32 = arith.constant 0 : i32
    %c0_i32_0 = arith.constant 0 : i32
    %c0_i32_1 = arith.constant 0 : i32
    %c0_i32_2 = arith.constant 0 : i32
    return %c0_i32, %c0_i32_0, %c0_i32_1 : i32, i32, i32
  }
  func.func @transform_13(%arg0: i32) -> (i32, i32) {
    %c0_i32 = arith.constant 0 : i32
    %c0_i32_0 = arith.constant 0 : i32
    %c0_i32_1 = arith.constant 0 : i32
    return %c0_i32, %c0_i32_0 : i32, i32
  }
  func.func @transform_14(%arg0: i32) -> (i32, i32) {
    %c0_i32 = arith.constant 0 : i32
    %c0_i32_0 = arith.constant 0 : i32
    %c0_i32_1 = arith.constant 0 : i32
    return %c0_i32, %c0_i32_0 : i32, i32
  }
  func.func @transform_15(%arg0: i32) -> (i32, i32) {
    %c0_i32 = arith.constant 0 : i32
    %c0_i32_0 = arith.constant 0 : i32
    %c0_i32_1 = arith.constant 0 : i32
    return %c0_i32, %c0_i32_0 : i32, i32
  }
  func.func @transform_16(%arg0: i32) -> (i32, i32, i32) {
    %c0_i32 = arith.constant 0 : i32
    %c0_i32_0 = arith.constant 0 : i32
    %c0_i32_1 = arith.constant 0 : i32
    return %arg0, %c0_i32, %c0_i32_0 : i32, i32, i32
  }
}

</mosaic_0001>

<llo_original>
// kernel: tpu_custom_call.1
$region0: #{tpu_custom_call.1}
  #allocation0 [shape = 'u32[]', space=smem, size = 0x4, offset = 0x4, fixed_abs, tag = 'smem constant byte address 0x4 - core index']
  #allocation1 [shape = 'u32[144,128]{1,0:T(1,128)}', space=vmem, size = 0x12000, scoped, tag = 'internal scratch']
  #allocation2 [shape = 'f32[18,64]{1,0:T(8,128)}', space=vmem, size = 0x3000, scoped, tag = 'scratch operand']
  #allocation3 [shape = 'f32[18,128]{1,0:T(8,128)}', space=vmem, size = 0x3000, scoped, tag = 'scratch operand']
  %s0 = inlined_call_operand.hbm [shape: f32[2,16,64], index: 0, kind: input, shape index: {}]
  %s1 = inlined_call_operand.vmem [shape: f32[2,1,128], index: 1, kind: input, shape index: {}]
  %s2 = inlined_call_operand.vmem [shape: f32[1,64], index: 2, kind: input, shape index: {}]
  %s3 = inlined_call_operand.vmem [shape: f32[1,64], index: 3, kind: input, shape index: {}]
  %s4 = inlined_call_operand.vmem [shape: f32[64,4], index: 4, kind: input, shape index: {}]
  %s5 = inlined_call_operand.vmem [shape: f32[4,64], index: 5, kind: input, shape index: {}]
  %s6 = inlined_call_operand.vmem [shape: f32[3,64,128], index: 6, kind: input, shape index: {}]
  %s7 = inlined_call_operand.vmem [shape: f32[1,128], index: 7, kind: input, shape index: {}]
  %s8 = inlined_call_operand.vmem [shape: f32[1,128], index: 8, kind: input, shape index: {}]
  %s9 = inlined_call_operand.vmem [shape: f32[1,128], index: 9, kind: input, shape index: {}]
  %s10 = inlined_call_operand.vmem [shape: f32[128,4], index: 10, kind: input, shape index: {}]
  %s11 = inlined_call_operand.vmem [shape: f32[4,128], index: 11, kind: input, shape index: {}]
  %s12 = inlined_call_operand.hbm [shape: f32[3,128,128], index: 12, kind: input, shape index: {}]
  %s13 = inlined_call_operand.vmem [shape: f32[1,128], index: 13, kind: input, shape index: {}]
  %s14 = inlined_call_operand.hbm [shape: f32[64,128], index: 14, kind: input, shape index: {}]
  %s15 = inlined_call_operand.vmem [shape: f32[1,128], index: 15, kind: input, shape index: {}]
  %s16 = inlined_call_operand.hbm [shape: f32[2,16,128], index: 16, kind: output, shape index: {}]
  %s17 = sld [smem:[#allocation0]]
  $region109: #{tpu_custom_call.1} parent=0
    _
  %s19 = ssub.s32 1, %s17
  %s20 = scalar_select 0, %s19, %s17
  $region1: #{tpu_custom_call.1} parent=0
    #allocation4 [shape = 'u8[16384]{0}', space=vmem, size = 0x4000, scoped, tag = 'input window, operand 0']
    #allocation5 [shape = 's32[2]{0}', space=sflag, size = 0x8, scoped, tag = 'scoped memory for tpu_custom_call.1']
    #allocation6 [shape = 's32[2]{0}', space=sflag, size = 0x8, scoped, tag = 'scoped memory for tpu_custom_call.1']
    #allocation7 [shape = 'u8[196608]{0}', space=vmem, size = 0x30000, scoped, tag = 'input window, operand 12, single buffered']
    #allocation8 [shape = 's32[1]{0}', space=sflag, size = 0x4, scoped, tag = 'scoped memory for tpu_custom_call.1']
    #allocation9 [shape = 'u8[32768]{0}', space=vmem, size = 0x8000, scoped, tag = 'input window, operand 14, single buffered']
    #allocation10 [shape = 'u8[16384]{0}', space=vmem, size = 0x4000, scoped, tag = 'output window, operand 0']
    %21 = vsyncpa [#allocation5], 0
    %s22 = scalar_lea.sflag [#allocation5], 1
    %23 = vsyncpa %s22, 0
    %24 = vsyncpa [#allocation8], 0
    %25 = vsyncpa [#allocation6], 0
    %s26 = scalar_lea.sflag [#allocation6], 1
    %27 = vsyncpa %s26, 0
    loop: start=0, step=1, limit=4
    $region2: #{tpu_custom_call.1} parent=1 // loop_pre_header
      _
    $region3: #{tpu_custom_call.1} parent=1 // loop_header
      %s29 = sphi 0, %s33
      %p30 = scmp.ge.s32.totalorder %s29, 4
      %s39 = sphi 0, %s41
      %s42 = sphi 0, %s39
      %s43 = sphi 0, %s42
      %s59 = sphi 0, %s43
      %s65 = sphi 0, %s67
      %s68 = sphi 0, %s65
      %s69 = sphi 0, %s68
      %s85 = sphi 0, %s69
      %s89 = sphi 0, %s89
      %s91 = sphi 0, %s89
      %s92 = sphi 0, %s91
      %s106 = sphi 0, %s92
      %s110 = sphi 0, %s110
      %s112 = sphi 0, %s110
      %s113 = sphi 0, %s112
      %s127 = sphi 0, %s113
      %s131 = sphi 0, %s131
      %s133 = sphi 0, %s131
      %s134 = sphi 0, %s133
      %s148 = sphi 0, %s134
      %s152 = sphi 0, %s152
      %s154 = sphi 0, %s152
      %s155 = sphi 0, %s154
      %s169 = sphi 0, %s155
      %s173 = sphi 0, %s173
      %s175 = sphi 0, %s173
      %s176 = sphi 0, %s175
      %s190 = sphi 0, %s176
      %s194 = sphi 0, %s194
      %s196 = sphi 0, %s194
      %s197 = sphi 0, %s196
      %s211 = sphi 0, %s197
      %s215 = sphi 0, %s215
      %s217 = sphi 0, %s215
      %s218 = sphi 0, %s217
      %s232 = sphi 0, %s218
      %s236 = sphi 0, %s236
      %s238 = sphi 0, %s236
      %s239 = sphi 0, %s238
      %s253 = sphi 0, %s239
      %s257 = sphi 0, %s257
      %s259 = sphi 0, %s257
      %s260 = sphi 0, %s259
      %s274 = sphi 0, %s260
      %s278 = sphi 0, %s278
      %s280 = sphi 0, %s278
      %s281 = sphi 0, %s280
      %s295 = sphi 0, %s281
      %s299 = sphi 0, %s299
      %s301 = sphi 0, %s299
      %s302 = sphi 0, %s301
      %s316 = sphi 0, %s302
      %s320 = sphi 0, %s320
      %s322 = sphi 0, %s320
      %s323 = sphi 0, %s322
      %s337 = sphi 0, %s323
      %s341 = sphi 0, %s341
      %s343 = sphi 0, %s341
      %s344 = sphi 0, %s343
      %s358 = sphi 0, %s344
      %s362 = sphi 0, %s362
      %s364 = sphi 0, %s362
      %s365 = sphi 0, %s364
      %s379 = sphi 0, %s365
      %s385 = sphi 0, %s387
      %s388 = sphi 0, %s385
      %s389 = sphi 0, %s388
      %s405 = sphi 0, %s389
    $region4: #{tpu_custom_call.1} parent=1 // loop_header_branch
      %32 = sbr.rel (%p30) target = $region8
    $region5: #{tpu_custom_call.1} parent=1 // loop_body
      %s34 = ssub.s32 %s29, 1
      %s35 = ssub.s32 %s29, 2
      %s36 = sadd.s32 %s29, 1
      %s37 = ssub.s32 %s29, %s36
      %p38 = scmp.eq.s32.totalorder %s37, 0
      %s40 = sadd.s32 %s39, 1
      %s41 = scalar_select %p38, %s39, %s40
      %p44 = pneg %p38
      %p45 = scmp.eq.s32.totalorder %s29, 1
      %p46 = por %p44, %p45
      %p47 = scmp.ne.s32.totalorder %s39, %s42
      %p48 = scmp.eq.s32.totalorder %s29, 0
      %p49 = por %p47, %p48
      %p50 = scmp.ne.s32.totalorder %s39, %s42
      %p51 = scmp.eq.s32.totalorder %s34, 1
      %p52 = por %p50, %p51
      %p53 = scmp.ne.s32.totalorder %s42, %s43
      %p54 = scmp.eq.s32.totalorder %s34, 0
      %p55 = por %p53, %p54
      %p56 = scmp.ne.s32.totalorder %s42, %s43
      %p57 = scmp.eq.s32.totalorder %s35, 1
      %p58 = por %p56, %p57
      %p60 = scmp.ne.s32.totalorder %s43, %s59
      %p61 = scmp.eq.s32.totalorder %s35, 0
      %p62 = por %p60, %p61
      %s63 = ssub.s32 %s29, %s36
      %p64 = scmp.eq.s32.totalorder %s63, 0
      %s66 = sadd.s32 %s65, 1
      %s67 = scalar_select %p64, %s65, %s66
      %p70 = pneg %p64
      %p71 = scmp.eq.s32.totalorder %s29, 1
      %p72 = por %p70, %p71
      %p73 = scmp.ne.s32.totalorder %s65, %s68
      %p74 = scmp.eq.s32.totalorder %s29, 0
      %p75 = por %p73, %p74
      %p76 = scmp.ne.s32.totalorder %s65, %s68
      %p77 = scmp.eq.s32.totalorder %s34, 1
      %p78 = por %p76, %p77
      %p79 = scmp.ne.s32.totalorder %s68, %s69
      %p80 = scmp.eq.s32.totalorder %s34, 0
      %p81 = por %p79, %p80
      %p82 = scmp.ne.s32.totalorder %s68, %s69
      %p83 = scmp.eq.s32.totalorder %s35, 1
      %p84 = por %p82, %p83
      %p86 = scmp.ne.s32.totalorder %s69, %s85
      %p87 = scmp.eq.s32.totalorder %s35, 0
      %p88 = por %p86, %p87
      %s90 = sadd.s32 %s89, 1
      %p93 = scmp.eq.s32.totalorder %s29, 1
      %p94 = scmp.ne.s32.totalorder %s89, %s91
      %p95 = scmp.eq.s32.totalorder %s29, 0
      %p96 = por %p94, %p95
      %p97 = scmp.ne.s32.totalorder %s89, %s91
      %p98 = scmp.eq.s32.totalorder %s34, 1
      %p99 = por %p97, %p98
      %p100 = scmp.ne.s32.totalorder %s91, %s92
      %p101 = scmp.eq.s32.totalorder %s34, 0
      %p102 = por %p100, %p101
      %p103 = scmp.ne.s32.totalorder %s91, %s92
      %p104 = scmp.eq.s32.totalorder %s35, 1
      %p105 = por %p103, %p104
      %p107 = scmp.ne.s32.totalorder %s92, %s106
      %p108 = scmp.eq.s32.totalorder %s35, 0
      %p109 = por %p107, %p108
      %s111 = sadd.s32 %s110, 1
      %p114 = scmp.eq.s32.totalorder %s29, 1
      %p115 = scmp.ne.s32.totalorder %s110, %s112
      %p116 = scmp.eq.s32.totalorder %s29, 0
      %p117 = por %p115, %p116
      %p118 = scmp.ne.s32.totalorder %s110, %s112
      %p119 = scmp.eq.s32.totalorder %s34, 1
      %p120 = por %p118, %p119
      %p121 = scmp.ne.s32.totalorder %s112, %s113
      %p122 = scmp.eq.s32.totalorder %s34, 0
      %p123 = por %p121, %p122
      %p124 = scmp.ne.s32.totalorder %s112, %s113
      %p125 = scmp.eq.s32.totalorder %s35, 1
      %p126 = por %p124, %p125
      %p128 = scmp.ne.s32.totalorder %s113, %s127
      %p129 = scmp.eq.s32.totalorder %s35, 0
      %p130 = por %p128, %p129
      %s132 = sadd.s32 %s131, 1
      %p135 = scmp.eq.s32.totalorder %s29, 1
      %p136 = scmp.ne.s32.totalorder %s131, %s133
      %p137 = scmp.eq.s32.totalorder %s29, 0
      %p138 = por %p136, %p137
      %p139 = scmp.ne.s32.totalorder %s131, %s133
      %p140 = scmp.eq.s32.totalorder %s34, 1
      %p141 = por %p139, %p140
      %p142 = scmp.ne.s32.totalorder %s133, %s134
      %p143 = scmp.eq.s32.totalorder %s34, 0
      %p144 = por %p142, %p143
      %p145 = scmp.ne.s32.totalorder %s133, %s134
      %p146 = scmp.eq.s32.totalorder %s35, 1
      %p147 = por %p145, %p146
      %p149 = scmp.ne.s32.totalorder %s134, %s148
      %p150 = scmp.eq.s32.totalorder %s35, 0
      %p151 = por %p149, %p150
      %s153 = sadd.s32 %s152, 1
      %p156 = scmp.eq.s32.totalorder %s29, 1
      %p157 = scmp.ne.s32.totalorder %s152, %s154
      %p158 = scmp.eq.s32.totalorder %s29, 0
      %p159 = por %p157, %p158
      %p160 = scmp.ne.s32.totalorder %s152, %s154
      %p161 = scmp.eq.s32.totalorder %s34, 1
      %p162 = por %p160, %p161
      %p163 = scmp.ne.s32.totalorder %s154, %s155
      %p164 = scmp.eq.s32.totalorder %s34, 0
      %p165 = por %p163, %p164
      %p166 = scmp.ne.s32.totalorder %s154, %s155
      %p167 = scmp.eq.s32.totalorder %s35, 1
      %p168 = por %p166, %p167
      %p170 = scmp.ne.s32.totalorder %s155, %s169
      %p171 = scmp.eq.s32.totalorder %s35, 0
      %p172 = por %p170, %p171
      %s174 = sadd.s32 %s173, 1
      %p177 = scmp.eq.s32.totalorder %s29, 1
      %p178 = scmp.ne.s32.totalorder %s173, %s175
      %p179 = scmp.eq.s32.totalorder %s29, 0
      %p180 = por %p178, %p179
      %p181 = scmp.ne.s32.totalorder %s173, %s175
      %p182 = scmp.eq.s32.totalorder %s34, 1
      %p183 = por %p181, %p182
      %p184 = scmp.ne.s32.totalorder %s175, %s176
      %p185 = scmp.eq.s32.totalorder %s34, 0
      %p186 = por %p184, %p185
      %p187 = scmp.ne.s32.totalorder %s175, %s176
      %p188 = scmp.eq.s32.totalorder %s35, 1
      %p189 = por %p187, %p188
      %p191 = scmp.ne.s32.totalorder %s176, %s190
      %p192 = scmp.eq.s32.totalorder %s35, 0
      %p193 = por %p191, %p192
      %s195 = sadd.s32 %s194, 1
      %p198 = scmp.eq.s32.totalorder %s29, 1
      %p199 = scmp.ne.s32.totalorder %s194, %s196
      %p200 = scmp.eq.s32.totalorder %s29, 0
      %p201 = por %p199, %p200
      %p202 = scmp.ne.s32.totalorder %s194, %s196
      %p203 = scmp.eq.s32.totalorder %s34, 1
      %p204 = por %p202, %p203
      %p205 = scmp.ne.s32.totalorder %s196, %s197
      %p206 = scmp.eq.s32.totalorder %s34, 0
      %p207 = por %p205, %p206
      %p208 = scmp.ne.s32.totalorder %s196, %s197
      %p209 = scmp.eq.s32.totalorder %s35, 1
      %p210 = por %p208, %p209
      %p212 = scmp.ne.s32.totalorder %s197, %s211
      %p213 = scmp.eq.s32.totalorder %s35, 0
      %p214 = por %p212, %p213
      %s216 = sadd.s32 %s215, 1
      %p219 = scmp.eq.s32.totalorder %s29, 1
      %p220 = scmp.ne.s32.totalorder %s215, %s217
      %p221 = scmp.eq.s32.totalorder %s29, 0
      %p222 = por %p220, %p221
      %p223 = scmp.ne.s32.totalorder %s215, %s217
      %p224 = scmp.eq.s32.totalorder %s34, 1
      %p225 = por %p223, %p224
      %p226 = scmp.ne.s32.totalorder %s217, %s218
      %p227 = scmp.eq.s32.totalorder %s34, 0
      %p228 = por %p226, %p227
      %p229 = scmp.ne.s32.totalorder %s217, %s218
      %p230 = scmp.eq.s32.totalorder %s35, 1
      %p231 = por %p229, %p230
      %p233 = scmp.ne.s32.totalorder %s218, %s232
      %p234 = scmp.eq.s32.totalorder %s35, 0
      %p235 = por %p233, %p234
      %s237 = sadd.s32 %s236, 1
      %p240 = scmp.eq.s32.totalorder %s29, 1
      %p241 = scmp.ne.s32.totalorder %s236, %s238
      %p242 = scmp.eq.s32.totalorder %s29, 0
      %p243 = por %p241, %p242
      %p244 = scmp.ne.s32.totalorder %s236, %s238
      %p245 = scmp.eq.s32.totalorder %s34, 1
      %p246 = por %p244, %p245
      %p247 = scmp.ne.s32.totalorder %s238, %s239
      %p248 = scmp.eq.s32.totalorder %s34, 0
      %p249 = por %p247, %p248
      %p250 = scmp.ne.s32.totalorder %s238, %s239
      %p251 = scmp.eq.s32.totalorder %s35, 1
      %p252 = por %p250, %p251
      %p254 = scmp.ne.s32.totalorder %s239, %s253
      %p255 = scmp.eq.s32.totalorder %s35, 0
      %p256 = por %p254, %p255
      %s258 = sadd.s32 %s257, 1
      %p261 = scmp.eq.s32.totalorder %s29, 1
      %p262 = scmp.ne.s32.totalorder %s257, %s259
      %p263 = scmp.eq.s32.totalorder %s29, 0
      %p264 = por %p262, %p263
      %p265 = scmp.ne.s32.totalorder %s257, %s259
      %p266 = scmp.eq.s32.totalorder %s34, 1
      %p267 = por %p265, %p266
      %p268 = scmp.ne.s32.totalorder %s259, %s260
      %p269 = scmp.eq.s32.totalorder %s34, 0
      %p270 = por %p268, %p269
      %p271 = scmp.ne.s32.totalorder %s259, %s260
      %p272 = scmp.eq.s32.totalorder %s35, 1
      %p273 = por %p271, %p272
      %p275 = scmp.ne.s32.totalorder %s260, %s274
      %p276 = scmp.eq.s32.totalorder %s35, 0
      %p277 = por %p275, %p276
      %s279 = sadd.s32 %s278, 1
      %p282 = scmp.eq.s32.totalorder %s29, 1
      %p283 = scmp.ne.s32.totalorder %s278, %s280
      %p284 = scmp.eq.s32.totalorder %s29, 0
      %p285 = por %p283, %p284
      %p286 = scmp.ne.s32.totalorder %s278, %s280
      %p287 = scmp.eq.s32.totalorder %s34, 1
      %p288 = por %p286, %p287
      %p289 = scmp.ne.s32.totalorder %s280, %s281
      %p290 = scmp.eq.s32.totalorder %s34, 0
      %p291 = por %p289, %p290
      %p292 = scmp.ne.s32.totalorder %s280, %s281
      %p293 = scmp.eq.s32.totalorder %s35, 1
      %p294 = por %p292, %p293
      %p296 = scmp.ne.s32.totalorder %s281, %s295
      %p297 = scmp.eq.s32.totalorder %s35, 0
      %p298 = por %p296, %p297
      %s300 = sadd.s32 %s299, 1
      %p303 = scmp.eq.s32.totalorder %s29, 1
      %p304 = scmp.ne.s32.totalorder %s299, %s301
      %p305 = scmp.eq.s32.totalorder %s29, 0
      %p306 = por %p304, %p305
      %p307 = scmp.ne.s32.totalorder %s299, %s301
      %p308 = scmp.eq.s32.totalorder %s34, 1
      %p309 = por %p307, %p308
      %p310 = scmp.ne.s32.totalorder %s301, %s302
      %p311 = scmp.eq.s32.totalorder %s34, 0
      %p312 = por %p310, %p311
      %p313 = scmp.ne.s32.totalorder %s301, %s302
      %p314 = scmp.eq.s32.totalorder %s35, 1
      %p315 = por %p313, %p314
      %p317 = scmp.ne.s32.totalorder %s302, %s316
      %p318 = scmp.eq.s32.totalorder %s35, 0
      %p319 = por %p317, %p318
      %s321 = sadd.s32 %s320, 1
      %p324 = scmp.eq.s32.totalorder %s29, 1
      %p325 = scmp.ne.s32.totalorder %s320, %s322
      %p326 = scmp.eq.s32.totalorder %s29, 0
      %p327 = por %p325, %p326
      %p328 = scmp.ne.s32.totalorder %s320, %s322
      %p329 = scmp.eq.s32.totalorder %s34, 1
      %p330 = por %p328, %p329
      %p331 = scmp.ne.s32.totalorder %s322, %s323
      %p332 = scmp.eq.s32.totalorder %s34, 0
      %p333 = por %p331, %p332
      %p334 = scmp.ne.s32.totalorder %s322, %s323
      %p335 = scmp.eq.s32.totalorder %s35, 1
      %p336 = por %p334, %p335
      %p338 = scmp.ne.s32.totalorder %s323, %s337
      %p339 = scmp.eq.s32.totalorder %s35, 0
      %p340 = por %p338, %p339
      %s342 = sadd.s32 %s341, 1
      %p345 = scmp.eq.s32.totalorder %s29, 1
      %p346 = scmp.ne.s32.totalorder %s341, %s343
      %p347 = scmp.eq.s32.totalorder %s29, 0
      %p348 = por %p346, %p347
      %p349 = scmp.ne.s32.totalorder %s341, %s343
      %p350 = scmp.eq.s32.totalorder %s34, 1
      %p351 = por %p349, %p350
      %p352 = scmp.ne.s32.totalorder %s343, %s344
      %p353 = scmp.eq.s32.totalorder %s34, 0
      %p354 = por %p352, %p353
      %p355 = scmp.ne.s32.totalorder %s343, %s344
      %p356 = scmp.eq.s32.totalorder %s35, 1
      %p357 = por %p355, %p356
      %p359 = scmp.ne.s32.totalorder %s344, %s358
      %p360 = scmp.eq.s32.totalorder %s35, 0
      %p361 = por %p359, %p360
      %s363 = sadd.s32 %s362, 1
      %p366 = scmp.eq.s32.totalorder %s29, 1
      %p367 = scmp.ne.s32.totalorder %s362, %s364
      %p368 = scmp.eq.s32.totalorder %s29, 0
      %p369 = por %p367, %p368
      %p370 = scmp.ne.s32.totalorder %s362, %s364
      %p371 = scmp.eq.s32.totalorder %s34, 1
      %p372 = por %p370, %p371
      %p373 = scmp.ne.s32.totalorder %s364, %s365
      %p374 = scmp.eq.s32.totalorder %s34, 0
      %p375 = por %p373, %p374
      %p376 = scmp.ne.s32.totalorder %s364, %s365
      %p377 = scmp.eq.s32.totalorder %s35, 1
      %p378 = por %p376, %p377
      %p380 = scmp.ne.s32.totalorder %s365, %s379
      %p381 = scmp.eq.s32.totalorder %s35, 0
      %p382 = por %p380, %p381
      %s383 = ssub.s32 %s29, %s36
      %p384 = scmp.eq.s32.totalorder %s383, 0
      %s386 = sadd.s32 %s385, 1
      %s387 = scalar_select %p384, %s385, %s386
      %p390 = pneg %p384
      %p391 = scmp.eq.s32.totalorder %s29, 1
      %p392 = por %p390, %p391
      %p393 = scmp.ne.s32.totalorder %s385, %s388
      %p394 = scmp.eq.s32.totalorder %s29, 0
      %p395 = por %p393, %p394
      %p396 = scmp.ne.s32.totalorder %s385, %s388
      %p397 = scmp.eq.s32.totalorder %s34, 1
      %p398 = por %p396, %p397
      %p399 = scmp.ne.s32.totalorder %s388, %s389
      %p400 = scmp.eq.s32.totalorder %s34, 0
      %p401 = por %p399, %p400
      %p402 = scmp.ne.s32.totalorder %s388, %s389
      %p403 = scmp.eq.s32.totalorder %s35, 1
      %p404 = por %p402, %p403
      %p406 = scmp.ne.s32.totalorder %s389, %s405
      %p407 = scmp.eq.s32.totalorder %s35, 0
      %p408 = por %p406, %p407
      %p409 = scmp.le.s32.totalorder 1, %s29
      %p410 = scmp.lt.s32.totalorder %s29, 3
      %p411 = pnand %p409, %p410
      %p412 = pneg %p411
      // Predicated region
      $region9: #{tpu_custom_call.1} parent=5 // pred_check
        _
      $region10: #{tpu_custom_call.1} parent=5 // pred_check_branch
        %414 = sbr.rel (%p411) target = $region12
      $region11: #{tpu_custom_call.1} parent=5 // pred_region
        %s415 = ssub.s32 %s29, 1
        // Predicated region
        $region13: #{tpu_custom_call.1} parent=11 // pred_check
          %p416 = pneg %p102
        $region14: #{tpu_custom_call.1} parent=11 // pred_check_branch
          %418 = sbr.rel (%p416) target = $region16
        $region15: #{tpu_custom_call.1} parent=11 // pred_region
          _
        $region16: #{tpu_custom_call.1} parent=11 // pred_fallthru
          _
        // Predicated region
        $region17: #{tpu_custom_call.1} parent=11 // pred_check
          %p419 = pneg %p123
        $region18: #{tpu_custom_call.1} parent=11 // pred_check_branch
          %421 = sbr.rel (%p419) target = $region20
        $region19: #{tpu_custom_call.1} parent=11 // pred_region
          _
        $region20: #{tpu_custom_call.1} parent=11 // pred_fallthru
          _
        // Predicated region
        $region21: #{tpu_custom_call.1} parent=11 // pred_check
          %p422 = pneg %p144
        $region22: #{tpu_custom_call.1} parent=11 // pred_check_branch
          %424 = sbr.rel (%p422) target = $region24
        $region23: #{tpu_custom_call.1} parent=11 // pred_region
          _
        $region24: #{tpu_custom_call.1} parent=11 // pred_fallthru
          _
        // Predicated region
        $region25: #{tpu_custom_call.1} parent=11 // pred_check
          %p425 = pneg %p165
        $region26: #{tpu_custom_call.1} parent=11 // pred_check_branch
          %427 = sbr.rel (%p425) target = $region28
        $region27: #{tpu_custom_call.1} parent=11 // pred_region
          _
        $region28: #{tpu_custom_call.1} parent=11 // pred_fallthru
          _
        // Predicated region
        $region29: #{tpu_custom_call.1} parent=11 // pred_check
          %p428 = pneg %p186
        $region30: #{tpu_custom_call.1} parent=11 // pred_check_branch
          %430 = sbr.rel (%p428) target = $region32
        $region31: #{tpu_custom_call.1} parent=11 // pred_region
          _
        $region32: #{tpu_custom_call.1} parent=11 // pred_fallthru
          _
        // Predicated region
        $region33: #{tpu_custom_call.1} parent=11 // pred_check
          %p431 = pneg %p207
        $region34: #{tpu_custom_call.1} parent=11 // pred_check_branch
          %433 = sbr.rel (%p431) target = $region36
        $region35: #{tpu_custom_call.1} parent=11 // pred_region
          _
        $region36: #{tpu_custom_call.1} parent=11 // pred_fallthru
          _
        // Predicated region
        $region37: #{tpu_custom_call.1} parent=11 // pred_check
          %p434 = pneg %p228
        $region38: #{tpu_custom_call.1} parent=11 // pred_check_branch
          %436 = sbr.rel (%p434) target = $region40
        $region39: #{tpu_custom_call.1} parent=11 // pred_region
          _
        $region40: #{tpu_custom_call.1} parent=11 // pred_fallthru
          _
        // Predicated region
        $region41: #{tpu_custom_call.1} parent=11 // pred_check
          %p437 = pneg %p249
        $region42: #{tpu_custom_call.1} parent=11 // pred_check_branch
          %439 = sbr.rel (%p437) target = $region44
        $region43: #{tpu_custom_call.1} parent=11 // pred_region
          _
        $region44: #{tpu_custom_call.1} parent=11 // pred_fallthru
          _
        // Predicated region
        $region45: #{tpu_custom_call.1} parent=11 // pred_check
          %p440 = pneg %p270
        $region46: #{tpu_custom_call.1} parent=11 // pred_check_branch
          %442 = sbr.rel (%p440) target = $region48
        $region47: #{tpu_custom_call.1} parent=11 // pred_region
          _
        $region48: #{tpu_custom_call.1} parent=11 // pred_fallthru
          _
        // Predicated region
        $region49: #{tpu_custom_call.1} parent=11 // pred_check
          %p443 = pneg %p291
        $region50: #{tpu_custom_call.1} parent=11 // pred_check_branch
          %445 = sbr.rel (%p443) target = $region52
        $region51: #{tpu_custom_call.1} parent=11 // pred_region
          _
        $region52: #{tpu_custom_call.1} parent=11 // pred_fallthru
          _
        // Predicated region
        $region53: #{tpu_custom_call.1} parent=11 // pred_check
          %p446 = pneg %p312
        $region54: #{tpu_custom_call.1} parent=11 // pred_check_branch
          %448 = sbr.rel (%p446) target = $region56
        $region55: #{tpu_custom_call.1} parent=11 // pred_region
          %s450 = ssub.s32 6144, 6144
          %451 = vsyncadd [#allocation8], %s450
          %s452 = sshll.u32 [#allocation7], 4
          %s453 = int_to_ptr.vmem [resolvable:$true] %s452
          %458 = dma.hbm_to_vmem [thread:$0]  %s12, 6144, %s453, [#allocation8], 128, 128, 8
        $region56: #{tpu_custom_call.1} parent=11 // pred_fallthru
          _
        // Predicated region
        $region57: #{tpu_custom_call.1} parent=11 // pred_check
          %p459 = pneg %p333
        $region58: #{tpu_custom_call.1} parent=11 // pred_check_branch
          %461 = sbr.rel (%p459) target = $region60
        $region59: #{tpu_custom_call.1} parent=11 // pred_region
          _
        $region60: #{tpu_custom_call.1} parent=11 // pred_fallthru
          _
        // Predicated region
        $region61: #{tpu_custom_call.1} parent=11 // pred_check
          %p462 = pneg %p354
        $region62: #{tpu_custom_call.1} parent=11 // pred_check_branch
          %464 = sbr.rel (%p462) target = $region64
        $region63: #{tpu_custom_call.1} parent=11 // pred_region
          %s466 = ssub.s32 1024, 1024
          %467 = vsyncadd [#allocation8], %s466
          %s468 = sshll.u32 [#allocation9], 4
          %s469 = int_to_ptr.vmem [resolvable:$true] %s468
          %474 = dma.hbm_to_vmem [thread:$0]  %s14, 1024, %s469, [#allocation8], 128, 128, 8
        $region64: #{tpu_custom_call.1} parent=11 // pred_fallthru
          _
        // Predicated region
        $region65: #{tpu_custom_call.1} parent=11 // pred_check
          %p475 = pneg %p375
        $region66: #{tpu_custom_call.1} parent=11 // pred_check_branch
          %477 = sbr.rel (%p475) target = $region68
        $region67: #{tpu_custom_call.1} parent=11 // pred_region
          _
        $region68: #{tpu_custom_call.1} parent=11 // pred_fallthru
          _
      $region12: #{tpu_custom_call.1} parent=5 // pred_fallthru
        _
      %p478 = scmp.lt.s32.totalorder %s29, 2
      // Predicated region
      $region69: #{tpu_custom_call.1} parent=5 // pred_check
        %p479 = pneg %p478
      $region70: #{tpu_custom_call.1} parent=5 // pred_check_branch
        %481 = sbr.rel (%p479) target = $region72
      $region71: #{tpu_custom_call.1} parent=5 // pred_region
        // Predicated region
        $region73: #{tpu_custom_call.1} parent=71 // pred_check
          %p482 = pneg %p49
        $region74: #{tpu_custom_call.1} parent=71 // pred_check_branch
          %484 = sbr.rel (%p482) target = $region76
        $region75: #{tpu_custom_call.1} parent=71 // pred_region
          %s485 = sand.u32 %s39, 1
          %s486 = scalar_lea.sflag [#allocation5], %s485
          %s487 = sand.u32 %s39, 1
          %s488 = smul.addr %s487, 16
          %s489 = scalar_lea.vmem [#allocation4], %s488
          %s491 = ssub.s32 256, 256
          %492 = vsyncadd %s486, %s491
          %s493 = smul.addr %s29, 2
          %s494 = smul.addr %s493, 128
          %s495 = scalar_lea.hbm %s0, %s494
          %s496 = sshll.u32 %s489, 4
          %s497 = int_to_ptr.vmem [resolvable:$true] %s496
          %502 = dma.hbm_to_vmem [thread:$0]  %s495, 256, %s497, %s486, 128, 128, 8
        $region76: #{tpu_custom_call.1} parent=71 // pred_fallthru
          _
        // Predicated region
        $region77: #{tpu_custom_call.1} parent=71 // pred_check
          %p503 = pneg %p75
        $region78: #{tpu_custom_call.1} parent=71 // pred_check_branch
          %505 = sbr.rel (%p503) target = $region80
        $region79: #{tpu_custom_call.1} parent=71 // pred_region
          %p506 = scmp.lt.s32.totalorder %s29, 1
          %s507 = scalar_select %p506, %s29, 1
          %s508 = scalar_lea.vmem %s1, %s507
        $region80: #{tpu_custom_call.1} parent=71 // pred_fallthru
          _
      $region72: #{tpu_custom_call.1} parent=5 // pred_fallthru
        _
      %p509 = scmp.le.s32.totalorder 1, %s29
      %p510 = scmp.lt.s32.totalorder %s29, 3
      %p511 = pnand %p509, %p510
      %p512 = pneg %p511
      // Predicated region
      $region81: #{tpu_custom_call.1} parent=5 // pred_check
        _
      $region82: #{tpu_custom_call.1} parent=5 // pred_check_branch
        %514 = sbr.rel (%p511) target = $region84
      $region83: #{tpu_custom_call.1} parent=5 // pred_region
        %s515 = ssub.s32 %s29, 1
        %s516 = sand.u32 %s42, 1
        %s517 = scalar_lea.sflag [#allocation5], %s516
        %s518 = sand.u32 %s42, 1
        %s519 = smul.addr %s518, 16
        %s520 = scalar_lea.vmem [#allocation4], %s519
        // Predicated region
        $region85: #{tpu_custom_call.1} parent=83 // pred_check
          %p521 = pneg %p55
        $region86: #{tpu_custom_call.1} parent=83 // pred_check_branch
          %523 = sbr.rel (%p521) target = $region88
        $region87: #{tpu_custom_call.1} parent=83 // pred_region
          %524 = dma.done %s517, 256
        $region88: #{tpu_custom_call.1} parent=83 // pred_fallthru
          _
        // Predicated region
        $region89: #{tpu_custom_call.1} parent=83 // pred_check
          %p525 = pneg %p312
        $region90: #{tpu_custom_call.1} parent=83 // pred_check_branch
          %527 = sbr.rel (%p525) target = $region92
        $region91: #{tpu_custom_call.1} parent=83 // pred_region
          %528 = dma.done [#allocation8], 6144
        $region92: #{tpu_custom_call.1} parent=83 // pred_fallthru
          _
        // Predicated region
        $region93: #{tpu_custom_call.1} parent=83 // pred_check
          %p529 = pneg %p354
        $region94: #{tpu_custom_call.1} parent=83 // pred_check_branch
          %531 = sbr.rel (%p529) target = $region96
        $region95: #{tpu_custom_call.1} parent=83 // pred_region
          %532 = dma.done [#allocation8], 1024
        $region96: #{tpu_custom_call.1} parent=83 // pred_fallthru
          _
        %s533 = sand.u32 %s42, 1
        %s534 = scalar_lea.sflag [#allocation5], %s533
        %s535 = sand.u32 %s42, 1
        %s536 = smul.addr %s535, 16
        %s537 = scalar_lea.vmem [#allocation4], %s536
        %p538 = pneg %p55
        %p539 = pneg %p52
        %p540 = scmp.lt.s32.totalorder %s34, 1
        %s541 = scalar_select %p540, %s34, 1
        %s542 = scalar_lea.vmem %s1, %s541
        %p543 = pneg %p81
        %p544 = pneg %p78
        %p545 = pneg %p102
        %p546 = pneg %p99
        %p547 = pneg %p123
        %p548 = pneg %p120
        %p549 = pneg %p144
        %p550 = pneg %p141
        %p551 = pneg %p165
        %p552 = pneg %p162
        %p553 = pneg %p186
        %p554 = pneg %p183
        %p555 = pneg %p207
        %p556 = pneg %p204
        %p557 = pneg %p228
        %p558 = pneg %p225
        %p559 = pneg %p249
        %p560 = pneg %p246
        %p561 = pneg %p270
        %p562 = pneg %p267
        %p563 = pneg %p291
        %p564 = pneg %p288
        %p565 = pneg %p312
        %p566 = pneg %p309
        %p567 = pneg %p333
        %p568 = pneg %p330
        %p569 = pneg %p354
        %p570 = pneg %p351
        %p571 = pneg %p375
        %p572 = pneg %p372
        %p573 = pneg %p401
        %p574 = pneg %p398
        %s575 = sand.u32 %s388, 1
        %s576 = scalar_lea.sflag [#allocation6], %s575
        %s577 = sand.u32 %s388, 1
        %s578 = smul.addr %s577, 16
        %s579 = scalar_lea.vmem [#allocation10], %s578
        %p580 = scmp.lt.s32.totalorder %s34, 1
        %s581 = scalar_select %p580, %s34, 1
        %s582 = scalar_lea.vmem %s1, %s581
        %v583 = vld [vmem:[%s520] sm:$0xff]
        %v584 = vld [vmem:[%s520 + $0x8] sm:$0xff]
        %v585 = vld [vmem:[%s582] sm:$0x1]
        %v586 = vld [vmem:[%s2] sm:$0x1]
        %v587 = vld [vmem:[%s3] sm:$0x1]
        %vm588 = vcmask 523264
        %v589 = vsel %vm588, %v583, 0.0
        %v590 = vsel %vm588, %v584, 0.0
        %v591 = vadd.f32 %v589, %v590
        %v592 = vrot.slane %v591, 4
        %v593 = vadd.f32 %v591, %v592
        %v594 = vrot.slane %v593, 2
        %v595 = vadd.f32 %v593, %v594
        %v596 = vrot.slane %v595, 1
        %v597 = vadd.f32 %v595, %v596
        %v598 = vmul.f32 %v583, %v583
        %v599 = vmul.f32 %v584, %v584
        %v600 = vsel %vm588, %v598, 0.0
        %v601 = vsel %vm588, %v599, 0.0
        %v602 = vadd.f32 %v600, %v601
        %v603 = vrot.slane %v602, 4
        %v604 = vadd.f32 %v602, %v603
        %v605 = vrot.slane %v604, 2
        %v606 = vadd.f32 %v604, %v605
        %v607 = vrot.slane %v606, 1
        %v608 = vadd.f32 %v606, %v607
        %v609 = vld [vmem:[%s4] sm:$0xff]
        %v610 = vld [vmem:[%s4 + $0x8] sm:$0xff]
        %v611 = vld [vmem:[%s4 + $0x10] sm:$0xff]
        %v612 = vld [vmem:[%s4 + $0x18] sm:$0xff]
        %v613 = vld [vmem:[%s4 + $0x20] sm:$0xff]
        %v614 = vld [vmem:[%s4 + $0x28] sm:$0xff]
        %v615 = vld [vmem:[%s4 + $0x30] sm:$0xff]
        %v616 = vld [vmem:[%s4 + $0x38] sm:$0xff]
        %v618 = vsel %vm588, %v597, 0
        %620 = vmatprep.subr.mxu0 0.0
        %621 = vmatpush1.msra.mxu0 %v609
        %622 = vmatprep.subr.mxu0 0.0
        %623 = vmatpush1.msra.mxu0 %v610
        %624 = vmatprep.subr.mxu0 0.0
        %625 = vmatpush1.msra.mxu0 %v611
        %626 = vmatprep.subr.mxu0 0.0
        %627 = vmatpush1.msra.mxu0 %v612
        %628 = vmatprep.subr.mxu0 0.0
        %629 = vmatpush1.msra.mxu0 %v613
        %630 = vmatprep.subr.mxu0 0.0
        %631 = vmatpush1.msra.mxu0 %v614
        %632 = vmatprep.subr.mxu0 0.0
        %633 = vmatpush1.msra.mxu0 %v615
        %634 = vmatprep.subr.mxu0 0.0
        %635 = vmatpush1.msra.mxu0 %v616
        %636 = vmatprep.subr.mxu0 0.0
        %637 = vmatpush1.msra.mxu0 0.0
        %638 = vmatprep.subr.mxu0 0.0
        %639 = vmatpush1.msra.mxu0 0.0
        %640 = vmatprep.subr.mxu0 0.0
        %641 = vmatpush1.msra.mxu0 0.0
        %642 = vmatprep.subr.mxu0 0.0
        %643 = vmatpush1.msra.mxu0 0.0
        %644 = vmatprep.subr.mxu0 0.0
        %645 = vmatpush1.msra.mxu0 0.0
        %646 = vmatprep.subr.mxu0 0.0
        %647 = vmatpush1.msra.mxu0 0.0
        %648 = vmatprep.subr.mxu0 0.0
        %649 = vmatpush1.msra.mxu0 0.0
        %650 = vmatprep.subr.mxu0 0.0
        %651 = vmatpush1.msra.mxu0 0.0
        %652 = vmatprep.subr.mxu0 0.0
        %653 = vmatpush1.msra.mxu0 0.0
        %654 = vmatprep.subr.mxu0 0.0
        %655 = vmatpush1.msra.mxu0 0.0
        %656 = vmatprep.subr.mxu0 0.0
        %657 = vmatpush1.msra.mxu0 0.0
        %658 = vmatprep.subr.mxu0 0.0
        %659 = vmatpush1.msra.mxu0 0.0
        %660 = vmatprep.subr.mxu0 0.0
        %661 = vmatpush1.msra.mxu0 0.0
        %662 = vmatprep.subr.mxu0 0.0
        %663 = vmatpush1.msra.mxu0 0.0
        %664 = vmatprep.subr.mxu0 0.0
        %665 = vmatpush1.msra.mxu0 0.0
        %666 = vmatprep.subr.mxu0 0.0
        %667 = vmatpush1.msra.mxu0 0.0
        %668 = vmatprep.subr.mxu0 0.0
        %669 = vmatpush1.msra.mxu0 0.0
        %670 = vmatprep.subr.mxu0 0.0
        %671 = vmatpush1.msra.mxu0 0.0
        %672 = vmatprep.subr.mxu0 0.0
        %673 = vmatpush1.msra.mxu0 0.0
        %674 = vmatprep.subr.mxu0 0.0
        %675 = vmatpush1.msra.mxu0 0.0
        %676 = vmatprep.subr.mxu0 0.0
        %677 = vmatpush1.msra.mxu0 0.0
        %678 = vmatprep.subr.mxu0 0.0
        %679 = vmatpush1.msra.mxu0 0.0
        %680 = vmatprep.subr.mxu0 0.0
        %681 = vmatpush1.msra.mxu0 0.0
        %682 = vmatprep.subr.mxu0 0.0
        %683 = vmatpush1.msra.mxu0 0.0
        %684 = vmatprep.mubr.f32.mxu0 0.0
        %685 = vmatmul.mubr.f32.gmra.mrb[0].mxu0 %v618
        %v686 = vpop.f32.mrb[0].mxu0
        %v687 = vadd.f32 0.0, %v686
        %v688 = vpop.f32.mrb[0].mxu0
        %689 = vdwg.mxu0
        %v691 = vsel %vm588, %v608, 0
        %693 = vmatprep.subr.mxu0 0.0
        %694 = vmatpush1.msra.mxu0 %v609
        %695 = vmatprep.subr.mxu0 0.0
        %696 = vmatpush1.msra.mxu0 %v610
        %697 = vmatprep.subr.mxu0 0.0
        %698 = vmatpush1.msra.mxu0 %v611
        %699 = vmatprep.subr.mxu0 0.0
        %700 = vmatpush1.msra.mxu0 %v612
        %701 = vmatprep.subr.mxu0 0.0
        %702 = vmatpush1.msra.mxu0 %v613
        %703 = vmatprep.subr.mxu0 0.0
        %704 = vmatpush1.msra.mxu0 %v614
        %705 = vmatprep.subr.mxu0 0.0
        %706 = vmatpush1.msra.mxu0 %v615
        %707 = vmatprep.subr.mxu0 0.0
        %708 = vmatpush1.msra.mxu0 %v616
        %709 = vmatprep.subr.mxu0 0.0
        %710 = vmatpush1.msra.mxu0 0.0
        %711 = vmatprep.subr.mxu0 0.0
        %712 = vmatpush1.msra.mxu0 0.0
        %713 = vmatprep.subr.mxu0 0.0
        %714 = vmatpush1.msra.mxu0 0.0
        %715 = vmatprep.subr.mxu0 0.0
        %716 = vmatpush1.msra.mxu0 0.0
        %717 = vmatprep.subr.mxu0 0.0
        %718 = vmatpush1.msra.mxu0 0.0
        %719 = vmatprep.subr.mxu0 0.0
        %720 = vmatpush1.msra.mxu0 0.0
        %721 = vmatprep.subr.mxu0 0.0
        %722 = vmatpush1.msra.mxu0 0.0
        %723 = vmatprep.subr.mxu0 0.0
        %724 = vmatpush1.msra.mxu0 0.0
        %725 = vmatprep.subr.mxu0 0.0
        %726 = vmatpush1.msra.mxu0 0.0
        %727 = vmatprep.subr.mxu0 0.0
        %728 = vmatpush1.msra.mxu0 0.0
        %729 = vmatprep.subr.mxu0 0.0
        %730 = vmatpush1.msra.mxu0 0.0
        %731 = vmatprep.subr.mxu0 0.0
        %732 = vmatpush1.msra.mxu0 0.0
        %733 = vmatprep.subr.mxu0 0.0
        %734 = vmatpush1.msra.mxu0 0.0
        %735 = vmatprep.subr.mxu0 0.0
        %736 = vmatpush1.msra.mxu0 0.0
        %737 = vmatprep.subr.mxu0 0.0
        %738 = vmatpush1.msra.mxu0 0.0
        %739 = vmatprep.subr.mxu0 0.0
        %740 = vmatpush1.msra.mxu0 0.0
        %741 = vmatprep.subr.mxu0 0.0
        %742 = vmatpush1.msra.mxu0 0.0
        %743 = vmatprep.subr.mxu0 0.0
        %744 = vmatpush1.msra.mxu0 0.0
        %745 = vmatprep.subr.mxu0 0.0
        %746 = vmatpush1.msra.mxu0 0.0
        %747 = vmatprep.subr.mxu0 0.0
        %748 = vmatpush1.msra.mxu0 0.0
        %749 = vmatprep.subr.mxu0 0.0
        %750 = vmatpush1.msra.mxu0 0.0
        %751 = vmatprep.subr.mxu0 0.0
        %752 = vmatpush1.msra.mxu0 0.0
        %753 = vmatprep.subr.mxu0 0.0
        %754 = vmatpush1.msra.mxu0 0.0
        %755 = vmatprep.subr.mxu0 0.0
        %756 = vmatpush1.msra.mxu0 0.0
        %757 = vmatprep.mubr.f32.mxu0 0.0
        %758 = vmatmul.mubr.f32.gmra.mrb[0].mxu0 %v691
        %v759 = vpop.f32.mrb[0].mxu0
        %v760 = vadd.f32 0.0, %v759
        %v761 = vpop.f32.mrb[0].mxu0
        %762 = vdwg.mxu0
        %v763 = vmul.f32 %v687, %v687
        %v764 = vsub.f32 %v760, %v763
        %v765 = vmax.f32 %v764, 0.0
        %v766 = vadd.f32 %v765, 1e-05
        %v767 = vrsqrt.pop %v766
        %v768 = vld [vmem:[%s5] sm:$0xf]
        %vm769 = vcmask 31744
        %v771 = vsel %vm769, %v687, 0
        %vm773 = vcmask 1043456
        %v775 = vsel %vm773, %v768, 0
        %777 = vmatprep.subr.mxu0 0.0
        %778 = vmatpush1.msra.mxu0 %v775
        %779 = vmatprep.subr.mxu0 0.0
        %780 = vmatpush1.msra.mxu0 0.0
        %781 = vmatprep.subr.mxu0 0.0
        %782 = vmatpush1.msra.mxu0 0.0
        %783 = vmatprep.subr.mxu0 0.0
        %784 = vmatpush1.msra.mxu0 0.0
        %785 = vmatprep.subr.mxu0 0.0
        %786 = vmatpush1.msra.mxu0 0.0
        %787 = vmatprep.subr.mxu0 0.0
        %788 = vmatpush1.msra.mxu0 0.0
        %789 = vmatprep.subr.mxu0 0.0
        %790 = vmatpush1.msra.mxu0 0.0
        %791 = vmatprep.subr.mxu0 0.0
        %792 = vmatpush1.msra.mxu0 0.0
        %793 = vmatprep.subr.mxu0 0.0
        %794 = vmatpush1.msra.mxu0 0.0
        %795 = vmatprep.subr.mxu0 0.0
        %796 = vmatpush1.msra.mxu0 0.0
        %797 = vmatprep.subr.mxu0 0.0
        %798 = vmatpush1.msra.mxu0 0.0
        %799 = vmatprep.subr.mxu0 0.0
        %800 = vmatpush1.msra.mxu0 0.0
        %801 = vmatprep.subr.mxu0 0.0
        %802 = vmatpush1.msra.mxu0 0.0
        %803 = vmatprep.subr.mxu0 0.0
        %804 = vmatpush1.msra.mxu0 0.0
        %805 = vmatprep.subr.mxu0 0.0
        %806 = vmatpush1.msra.mxu0 0.0
        %807 = vmatprep.subr.mxu0 0.0
        %808 = vmatpush1.msra.mxu0 0.0
        %809 = vmatprep.subr.mxu0 0.0
        %810 = vmatpush1.msra.mxu0 0.0
        %811 = vmatprep.subr.mxu0 0.0
        %812 = vmatpush1.msra.mxu0 0.0
        %813 = vmatprep.subr.mxu0 0.0
        %814 = vmatpush1.msra.mxu0 0.0
        %815 = vmatprep.subr.mxu0 0.0
        %816 = vmatpush1.msra.mxu0 0.0
        %817 = vmatprep.subr.mxu0 0.0
        %818 = vmatpush1.msra.mxu0 0.0
        %819 = vmatprep.subr.mxu0 0.0
        %820 = vmatpush1.msra.mxu0 0.0
        %821 = vmatprep.subr.mxu0 0.0
        %822 = vmatpush1.msra.mxu0 0.0
        %823 = vmatprep.subr.mxu0 0.0
        %824 = vmatpush1.msra.mxu0 0.0
        %825 = vmatprep.subr.mxu0 0.0
        %826 = vmatpush1.msra.mxu0 0.0
        %827 = vmatprep.subr.mxu0 0.0
        %828 = vmatpush1.msra.mxu0 0.0
        %829 = vmatprep.subr.mxu0 0.0
        %830 = vmatpush1.msra.mxu0 0.0
        %831 = vmatprep.subr.mxu0 0.0
        %832 = vmatpush1.msra.mxu0 0.0
        %833 = vmatprep.subr.mxu0 0.0
        %834 = vmatpush1.msra.mxu0 0.0
        %835 = vmatprep.subr.mxu0 0.0
        %836 = vmatpush1.msra.mxu0 0.0
        %837 = vmatprep.subr.mxu0 0.0
        %838 = vmatpush1.msra.mxu0 0.0
        %839 = vmatprep.subr.mxu0 0.0
        %840 = vmatpush1.msra.mxu0 0.0
        %841 = vmatprep.mubr.f32.mxu0 0.0
        %842 = vmatmul.mubr.f32.gmra.mrb[0].mxu0 %v771
        %v843 = vpop.f32.mrb[0].mxu0
        %v844 = vadd.f32 0.0, %v843
        %v845 = vpop.f32.mrb[0].mxu0
        %846 = vdwg.mxu0
        %v848 = vsel %vm769, %v767, 0
        %850 = vmatprep.subr.mxu0 0.0
        %851 = vmatpush1.msra.mxu0 %v775
        %852 = vmatprep.subr.mxu0 0.0
        %853 = vmatpush1.msra.mxu0 0.0
        %854 = vmatprep.subr.mxu0 0.0
        %855 = vmatpush1.msra.mxu0 0.0
        %856 = vmatprep.subr.mxu0 0.0
        %857 = vmatpush1.msra.mxu0 0.0
        %858 = vmatprep.subr.mxu0 0.0
        %859 = vmatpush1.msra.mxu0 0.0
        %860 = vmatprep.subr.mxu0 0.0
        %861 = vmatpush1.msra.mxu0 0.0
        %862 = vmatprep.subr.mxu0 0.0
        %863 = vmatpush1.msra.mxu0 0.0
        %864 = vmatprep.subr.mxu0 0.0
        %865 = vmatpush1.msra.mxu0 0.0
        %866 = vmatprep.subr.mxu0 0.0
        %867 = vmatpush1.msra.mxu0 0.0
        %868 = vmatprep.subr.mxu0 0.0
        %869 = vmatpush1.msra.mxu0 0.0
        %870 = vmatprep.subr.mxu0 0.0
        %871 = vmatpush1.msra.mxu0 0.0
        %872 = vmatprep.subr.mxu0 0.0
        %873 = vmatpush1.msra.mxu0 0.0
        %874 = vmatprep.subr.mxu0 0.0
        %875 = vmatpush1.msra.mxu0 0.0
        %876 = vmatprep.subr.mxu0 0.0
        %877 = vmatpush1.msra.mxu0 0.0
        %878 = vmatprep.subr.mxu0 0.0
        %879 = vmatpush1.msra.mxu0 0.0
        %880 = vmatprep.subr.mxu0 0.0
        %881 = vmatpush1.msra.mxu0 0.0
        %882 = vmatprep.subr.mxu0 0.0
        %883 = vmatpush1.msra.mxu0 0.0
        %884 = vmatprep.subr.mxu0 0.0
        %885 = vmatpush1.msra.mxu0 0.0
        %886 = vmatprep.subr.mxu0 0.0
        %887 = vmatpush1.msra.mxu0 0.0
        %888 = vmatprep.subr.mxu0 0.0
        %889 = vmatpush1.msra.mxu0 0.0
        %890 = vmatprep.subr.mxu0 0.0
        %891 = vmatpush1.msra.mxu0 0.0
        %892 = vmatprep.subr.mxu0 0.0
        %893 = vmatpush1.msra.mxu0 0.0
        %894 = vmatprep.subr.mxu0 0.0
        %895 = vmatpush1.msra.mxu0 0.0
        %896 = vmatprep.subr.mxu0 0.0
        %897 = vmatpush1.msra.mxu0 0.0
        %898 = vmatprep.subr.mxu0 0.0
        %899 = vmatpush1.msra.mxu0 0.0
        %900 = vmatprep.subr.mxu0 0.0
        %901 = vmatpush1.msra.mxu0 0.0
        %902 = vmatprep.subr.mxu0 0.0
        %903 = vmatpush1.msra.mxu0 0.0
        %904 = vmatprep.subr.mxu0 0.0
        %905 = vmatpush1.msra.mxu0 0.0
        %906 = vmatprep.subr.mxu0 0.0
        %907 = vmatpush1.msra.mxu0 0.0
        %908 = vmatprep.subr.mxu0 0.0
        %909 = vmatpush1.msra.mxu0 0.0
        %910 = vmatprep.subr.mxu0 0.0
        %911 = vmatpush1.msra.mxu0 0.0
        %912 = vmatprep.subr.mxu0 0.0
        %913 = vmatpush1.msra.mxu0 0.0
        %914 = vmatprep.mubr.f32.mxu0 0.0
        %915 = vmatmul.mubr.f32.gmra.mrb[0].mxu0 %v848
        %v916 = vpop.f32.mrb[0].mxu0
        %v917 = vadd.f32 0.0, %v916
        %v918 = vpop.f32.mrb[0].mxu0
        %919 = vdwg.mxu0
        %v920 = vmul.f32 %v586, %v917
        %v921 = vmul.f32 %v844, %v920
        %v922 = vsub.f32 %v587, %v921
        %v924 = vlaneseq
        %v925 = vshrl.u32 %v924, 7
        %v926 = vsub.s32 0, %v925
        %v927 = vrot.slane %v920, %v926
        %v929 = vmul.f32 %v583, %v927
        %v930 = vmul.f32 %v584, %v927
        %v932 = vlaneseq
        %v933 = vshrl.u32 %v932, 7
        %v934 = vsub.s32 0, %v933
        %v935 = vrot.slane %v922, %v934
        %v937 = vadd.f32 %v929, %v935
        %v938 = vadd.f32 %v930, %v935
        %v939 = vxor.u32 %v937, 2147483648
        %v940 = vxor.u32 %v938, 2147483648
        %v941 = vmul.f32 %v939, 1.442695
        %v942 = vpow.pop %v941
        %v943 = vmul.f32 %v940, 1.442695
        %v944 = vpow.pop %v943
        %v945 = vadd.f32 %v942, 1.0
        %v946 = vadd.f32 %v944, 1.0
        %v947 = vrcp.pop %v945
        %v948 = vmul.f32 1.0, %v947
        %v949 = vrcp.pop %v946
        %v950 = vmul.f32 1.0, %v949
        %v951 = vmul.f32 %v937, %v948
        %v952 = vmul.f32 %v938, %v950
        %vm953 = vcmask 516096
        %954 = vst.msk [vmem:[#allocation2] sm:$0x1] %vm953, 0.0
        %955 = vst.msk [vmem:[#allocation2 + $0x11] sm:$0x1] %vm953, 0.0
        %956 = vst.msk [vmem:[#allocation2 + $0x1] sm:$0xff] %vm588, %v951
        %957 = vst.msk [vmem:[#allocation2 + $0x9] sm:$0xff] %vm588, %v952
        %v958 = vld [vmem:[#allocation2] sm:$0xff]
        %v959 = vld [vmem:[#allocation2 + $0x8] sm:$0xff]
        %v960 = vld [vmem:[%s6] sm:$0xff]
        %v961 = vld [vmem:[%s6 + $0x8] sm:$0xff]
        %v962 = vld [vmem:[%s6 + $0x10] sm:$0xff]
        %v963 = vld [vmem:[%s6 + $0x18] sm:$0xff]
        %v964 = vld [vmem:[%s6 + $0x20] sm:$0xff]
        %v965 = vld [vmem:[%s6 + $0x28] sm:$0xff]
        %v966 = vld [vmem:[%s6 + $0x30] sm:$0xff]
        %v967 = vld [vmem:[%s6 + $0x38] sm:$0xff]
        %v968 = vld [vmem:[#allocation2 + $0x1] sm:$0xff]
        %v969 = vld [vmem:[#allocation2 + $0x9] sm:$0xff]
        %s970 = scalar_lea.vmem %s6, 64
        %v971 = vld [vmem:[%s970] sm:$0xff]
        %v972 = vld [vmem:[%s970 + $0x8] sm:$0xff]
        %v973 = vld [vmem:[%s970 + $0x10] sm:$0xff]
        %v974 = vld [vmem:[%s970 + $0x18] sm:$0xff]
        %v975 = vld [vmem:[%s970 + $0x20] sm:$0xff]
        %v976 = vld [vmem:[%s970 + $0x28] sm:$0xff]
        %v977 = vld [vmem:[%s970 + $0x30] sm:$0xff]
        %v978 = vld [vmem:[%s970 + $0x38] sm:$0xff]
        %v980 = vsel %vm588, %v968, 0
        %v983 = vsel %vm588, %v969, 0
        %985 = vmatprep.subr.mxu0 0.0
        %986 = vmatpush1.msra.mxu0 %v971
        %987 = vmatprep.subr.mxu0 0.0
        %988 = vmatpush1.msra.mxu0 %v972
        %989 = vmatprep.subr.mxu0 0.0
        %990 = vmatpush1.msra.mxu0 %v973
        %991 = vmatprep.subr.mxu0 0.0
        %992 = vmatpush1.msra.mxu0 %v974
        %993 = vmatprep.subr.mxu0 0.0
        %994 = vmatpush1.msra.mxu0 %v975
        %995 = vmatprep.subr.mxu0 0.0
        %996 = vmatpush1.msra.mxu0 %v976
        %997 = vmatprep.subr.mxu0 0.0
        %998 = vmatpush1.msra.mxu0 %v977
        %999 = vmatprep.subr.mxu0 0.0
        %1000 = vmatpush1.msra.mxu0 %v978
        %1001 = vmatprep.subr.mxu0 0.0
        %1002 = vmatpush1.msra.mxu0 0.0
        %1003 = vmatprep.subr.mxu0 0.0
        %1004 = vmatpush1.msra.mxu0 0.0
        %1005 = vmatprep.subr.mxu0 0.0
        %1006 = vmatpush1.msra.mxu0 0.0
        %1007 = vmatprep.subr.mxu0 0.0
        %1008 = vmatpush1.msra.mxu0 0.0
        %1009 = vmatprep.subr.mxu0 0.0
        %1010 = vmatpush1.msra.mxu0 0.0
        %1011 = vmatprep.subr.mxu0 0.0
        %1012 = vmatpush1.msra.mxu0 0.0
        %1013 = vmatprep.subr.mxu0 0.0
        %1014 = vmatpush1.msra.mxu0 0.0
        %1015 = vmatprep.subr.mxu0 0.0
        %1016 = vmatpush1.msra.mxu0 0.0
        %1017 = vmatprep.subr.mxu0 0.0
        %1018 = vmatpush1.msra.mxu0 0.0
        %1019 = vmatprep.subr.mxu0 0.0
        %1020 = vmatpush1.msra.mxu0 0.0
        %1021 = vmatprep.subr.mxu0 0.0
        %1022 = vmatpush1.msra.mxu0 0.0
        %1023 = vmatprep.subr.mxu0 0.0
        %1024 = vmatpush1.msra.mxu0 0.0
        %1025 = vmatprep.subr.mxu0 0.0
        %1026 = vmatpush1.msra.mxu0 0.0
        %1027 = vmatprep.subr.mxu0 0.0
        %1028 = vmatpush1.msra.mxu0 0.0
        %1029 = vmatprep.subr.mxu0 0.0
        %1030 = vmatpush1.msra.mxu0 0.0
        %1031 = vmatprep.subr.mxu0 0.0
        %1032 = vmatpush1.msra.mxu0 0.0
        %1033 = vmatprep.subr.mxu0 0.0
        %1034 = vmatpush1.msra.mxu0 0.0
        %1035 = vmatprep.subr.mxu0 0.0
        %1036 = vmatpush1.msra.mxu0 0.0
        %1037 = vmatprep.subr.mxu0 0.0
        %1038 = vmatpush1.msra.mxu0 0.0
        %1039 = vmatprep.subr.mxu0 0.0
        %1040 = vmatpush1.msra.mxu0 0.0
        %1041 = vmatprep.subr.mxu0 0.0
        %1042 = vmatpush1.msra.mxu0 0.0
        %1043 = vmatprep.subr.mxu0 0.0
        %1044 = vmatpush1.msra.mxu0 0.0
        %1045 = vmatprep.subr.mxu0 0.0
        %1046 = vmatpush1.msra.mxu0 0.0
        %1047 = vmatprep.subr.mxu0 0.0
        %1048 = vmatpush1.msra.mxu0 0.0
        %1049 = vmatprep.mubr.f32.mxu0 0.0
        %1050 = vmatmul.mubr.f32.gmra.mrb[0].mxu0 %v980
        %v1051 = vpop.f32.mrb[0].mxu0
        %v1052 = vadd.f32 0.0, %v1051
        %v1053 = vpop.f32.mrb[0].mxu0
        %1054 = vmatprep.mubr.f32.mxu0 0.0
        %1055 = vmatmul.mubr.f32.gmra.mrb[0].mxu0 %v983
        %v1056 = vpop.f32.mrb[0].mxu0
        %v1057 = vadd.f32 0.0, %v1056
        %v1058 = vpop.f32.mrb[0].mxu0
        %1059 = vdwg.mxu0
        %v1061 = vsel %vm588, %v958, 0
        %v1064 = vsel %vm588, %v959, 0
        %1066 = vmatprep.subr.mxu0 0.0
        %1067 = vmatpush1.msra.mxu0 %v960
        %1068 = vmatprep.subr.mxu0 0.0
        %1069 = vmatpush1.msra.mxu0 %v961
        %1070 = vmatprep.subr.mxu0 0.0
        %1071 = vmatpush1.msra.mxu0 %v962
        %1072 = vmatprep.subr.mxu0 0.0
        %1073 = vmatpush1.msra.mxu0 %v963
        %1074 = vmatprep.subr.mxu0 0.0
        %1075 = vmatpush1.msra.mxu0 %v964
        %1076 = vmatprep.subr.mxu0 0.0
        %1077 = vmatpush1.msra.mxu0 %v965
        %1078 = vmatprep.subr.mxu0 0.0
        %1079 = vmatpush1.msra.mxu0 %v966
        %1080 = vmatprep.subr.mxu0 0.0
        %1081 = vmatpush1.msra.mxu0 %v967
        %1082 = vmatprep.subr.mxu0 0.0
        %1083 = vmatpush1.msra.mxu0 0.0
        %1084 = vmatprep.subr.mxu0 0.0
        %1085 = vmatpush1.msra.mxu0 0.0
        %1086 = vmatprep.subr.mxu0 0.0
        %1087 = vmatpush1.msra.mxu0 0.0
        %1088 = vmatprep.subr.mxu0 0.0
        %1089 = vmatpush1.msra.mxu0 0.0
        %1090 = vmatprep.subr.mxu0 0.0
        %1091 = vmatpush1.msra.mxu0 0.0
        %1092 = vmatprep.subr.mxu0 0.0
        %1093 = vmatpush1.msra.mxu0 0.0
        %1094 = vmatprep.subr.mxu0 0.0
        %1095 = vmatpush1.msra.mxu0 0.0
        %1096 = vmatprep.subr.mxu0 0.0
        %1097 = vmatpush1.msra.mxu0 0.0
        %1098 = vmatprep.subr.mxu0 0.0
        %1099 = vmatpush1.msra.mxu0 0.0
        %1100 = vmatprep.subr.mxu0 0.0
        %1101 = vmatpush1.msra.mxu0 0.0
        %1102 = vmatprep.subr.mxu0 0.0
        %1103 = vmatpush1.msra.mxu0 0.0
        %1104 = vmatprep.subr.mxu0 0.0
        %1105 = vmatpush1.msra.mxu0 0.0
        %1106 = vmatprep.subr.mxu0 0.0
        %1107 = vmatpush1.msra.mxu0 0.0
        %1108 = vmatprep.subr.mxu0 0.0
        %1109 = vmatpush1.msra.mxu0 0.0
        %1110 = vmatprep.subr.mxu0 0.0
        %1111 = vmatpush1.msra.mxu0 0.0
        %1112 = vmatprep.subr.mxu0 0.0
        %1113 = vmatpush1.msra.mxu0 0.0
        %1114 = vmatprep.subr.mxu0 0.0
        %1115 = vmatpush1.msra.mxu0 0.0
        %1116 = vmatprep.subr.mxu0 0.0
        %1117 = vmatpush1.msra.mxu0 0.0
        %1118 = vmatprep.subr.mxu0 0.0
        %1119 = vmatpush1.msra.mxu0 0.0
        %1120 = vmatprep.subr.mxu0 0.0
        %1121 = vmatpush1.msra.mxu0 0.0
        %1122 = vmatprep.subr.mxu0 0.0
        %1123 = vmatpush1.msra.mxu0 0.0
        %1124 = vmatprep.subr.mxu0 0.0
        %1125 = vmatpush1.msra.mxu0 0.0
        %1126 = vmatprep.subr.mxu0 0.0
        %1127 = vmatpush1.msra.mxu0 0.0
        %1128 = vmatprep.subr.mxu0 0.0
        %1129 = vmatpush1.msra.mxu0 0.0
        %1130 = vmatprep.mubr.f32.mxu0 0.0
        %1131 = vmatmul.mubr.f32.gmra.mrb[0].mxu0 %v1061
        %v1132 = vpop.f32.mrb[0].mxu0
        %v1133 = vadd.f32 %v1052, %v1132
        %v1134 = vpop.f32.mrb[0].mxu0
        %1135 = vmatprep.mubr.f32.mxu0 0.0
        %1136 = vmatmul.mubr.f32.gmra.mrb[0].mxu0 %v1064
        %v1137 = vpop.f32.mrb[0].mxu0
        %v1138 = vadd.f32 %v1057, %v1137
        %v1139 = vpop.f32.mrb[0].mxu0
        %1140 = vdwg.mxu0
        %v1141 = vld [vmem:[#allocation2 + $0x2] sm:$0xff]
        %v1142 = vld [vmem:[#allocation2 + $0xa] sm:$0xff]
        %s1143 = scalar_lea.vmem %s6, 128
        %v1144 = vld [vmem:[%s1143] sm:$0xff]
        %v1145 = vld [vmem:[%s1143 + $0x8] sm:$0xff]
        %v1146 = vld [vmem:[%s1143 + $0x10] sm:$0xff]
        %v1147 = vld [vmem:[%s1143 + $0x18] sm:$0xff]
        %v1148 = vld [vmem:[%s1143 + $0x20] sm:$0xff]
        %v1149 = vld [vmem:[%s1143 + $0x28] sm:$0xff]
        %v1150 = vld [vmem:[%s1143 + $0x30] sm:$0xff]
        %v1151 = vld [vmem:[%s1143 + $0x38] sm:$0xff]
        %v1153 = vsel %vm588, %v1141, 0
        %v1156 = vsel %vm588, %v1142, 0
        %1158 = vmatprep.subr.mxu0 0.0
        %1159 = vmatpush1.msra.mxu0 %v1144
        %1160 = vmatprep.subr.mxu0 0.0
        %1161 = vmatpush1.msra.mxu0 %v1145
        %1162 = vmatprep.subr.mxu0 0.0
        %1163 = vmatpush1.msra.mxu0 %v1146
        %1164 = vmatprep.subr.mxu0 0.0
        %1165 = vmatpush1.msra.mxu0 %v1147
        %1166 = vmatprep.subr.mxu0 0.0
        %1167 = vmatpush1.msra.mxu0 %v1148
        %1168 = vmatprep.subr.mxu0 0.0
        %1169 = vmatpush1.msra.mxu0 %v1149
        %1170 = vmatprep.subr.mxu0 0.0
        %1171 = vmatpush1.msra.mxu0 %v1150
        %1172 = vmatprep.subr.mxu0 0.0
        %1173 = vmatpush1.msra.mxu0 %v1151
        %1174 = vmatprep.subr.mxu0 0.0
        %1175 = vmatpush1.msra.mxu0 0.0
        %1176 = vmatprep.subr.mxu0 0.0
        %1177 = vmatpush1.msra.mxu0 0.0
        %1178 = vmatprep.subr.mxu0 0.0
        %1179 = vmatpush1.msra.mxu0 0.0
        %1180 = vmatprep.subr.mxu0 0.0
        %1181 = vmatpush1.msra.mxu0 0.0
        %1182 = vmatprep.subr.mxu0 0.0
        %1183 = vmatpush1.msra.mxu0 0.0
        %1184 = vmatprep.subr.mxu0 0.0
        %1185 = vmatpush1.msra.mxu0 0.0
        %1186 = vmatprep.subr.mxu0 0.0
        %1187 = vmatpush1.msra.mxu0 0.0
        %1188 = vmatprep.subr.mxu0 0.0
        %1189 = vmatpush1.msra.mxu0 0.0
        %1190 = vmatprep.subr.mxu0 0.0
        %1191 = vmatpush1.msra.mxu0 0.0
        %1192 = vmatprep.subr.mxu0 0.0
        %1193 = vmatpush1.msra.mxu0 0.0
        %1194 = vmatprep.subr.mxu0 0.0
        %1195 = vmatpush1.msra.mxu0 0.0
        %1196 = vmatprep.subr.mxu0 0.0
        %1197 = vmatpush1.msra.mxu0 0.0
        %1198 = vmatprep.subr.mxu0 0.0
        %1199 = vmatpush1.msra.mxu0 0.0
        %1200 = vmatprep.subr.mxu0 0.0
        %1201 = vmatpush1.msra.mxu0 0.0
        %1202 = vmatprep.subr.mxu0 0.0
        %1203 = vmatpush1.msra.mxu0 0.0
        %1204 = vmatprep.subr.mxu0 0.0
        %1205 = vmatpush1.msra.mxu0 0.0
        %1206 = vmatprep.subr.mxu0 0.0
        %1207 = vmatpush1.msra.mxu0 0.0
        %1208 = vmatprep.subr.mxu0 0.0
        %1209 = vmatpush1.msra.mxu0 0.0
        %1210 = vmatprep.subr.mxu0 0.0
        %1211 = vmatpush1.msra.mxu0 0.0
        %1212 = vmatprep.subr.mxu0 0.0
        %1213 = vmatpush1.msra.mxu0 0.0
        %1214 = vmatprep.subr.mxu0 0.0
        %1215 = vmatpush1.msra.mxu0 0.0
        %1216 = vmatprep.subr.mxu0 0.0
        %1217 = vmatpush1.msra.mxu0 0.0
        %1218 = vmatprep.subr.mxu0 0.0
        %1219 = vmatpush1.msra.mxu0 0.0
        %1220 = vmatprep.subr.mxu0 0.0
        %1221 = vmatpush1.msra.mxu0 0.0
        %1222 = vmatprep.mubr.f32.mxu0 0.0
        %1223 = vmatmul.mubr.f32.gmra.mrb[0].mxu0 %v1153
        %v1224 = vpop.f32.mrb[0].mxu0
        %v1225 = vadd.f32 0.0, %v1224
        %v1226 = vpop.f32.mrb[0].mxu0
        %1227 = vmatprep.mubr.f32.mxu0 0.0
        %1228 = vmatmul.mubr.f32.gmra.mrb[0].mxu0 %v1156
        %v1229 = vpop.f32.mrb[0].mxu0
        %v1230 = vadd.f32 0.0, %v1229
        %v1231 = vpop.f32.mrb[0].mxu0
        %1232 = vdwg.mxu0
        %v1233 = vadd.f32 %v1133, %v1225
        %v1234 = vadd.f32 %v1138, %v1230
        %v1235 = vld [vmem:[%s7] sm:$0x1]
        %v1237 = vlaneseq
        %v1238 = vshrl.u32 %v1237, 7
        %v1239 = vsub.s32 0, %v1238
        %v1240 = vrot.slane %v1235, %v1239
        %v1242 = vadd.f32 %v1233, %v1240
        %v1243 = vadd.f32 %v1234, %v1240
        %v1245 = vlaneseq
        %v1246 = vshrl.u32 %v1245, 7
        %v1247 = vsub.s32 0, %v1246
        %v1248 = vrot.slane %v585, %v1247
        %v1250 = vadd.f32 %v1242, %v1248
        %v1251 = vadd.f32 %v1243, %v1248
        %v1252 = vld [vmem:[%s8] sm:$0x1]
        %v1253 = vld [vmem:[%s9] sm:$0x1]
        %v1254 = vadd.f32 %v1250, %v1251
        %v1255 = vrot.slane %v1254, 4
        %v1256 = vadd.f32 %v1254, %v1255
        %v1257 = vrot.slane %v1256, 2
        %v1258 = vadd.f32 %v1256, %v1257
        %v1259 = vrot.slane %v1258, 1
        %v1260 = vadd.f32 %v1258, %v1259
        %v1261 = vmul.f32 %v1250, %v1250
        %v1262 = vmul.f32 %v1251, %v1251
        %v1263 = vadd.f32 %v1261, %v1262
        %v1264 = vrot.slane %v1263, 4
        %v1265 = vadd.f32 %v1263, %v1264
        %v1266 = vrot.slane %v1265, 2
        %v1267 = vadd.f32 %v1265, %v1266
        %v1268 = vrot.slane %v1267, 1
        %v1269 = vadd.f32 %v1267, %v1268
        %v1270 = vld [vmem:[%s10] sm:$0xff]
        %v1271 = vld [vmem:[%s10 + $0x8] sm:$0xff]
        %v1272 = vld [vmem:[%s10 + $0x10] sm:$0xff]
        %v1273 = vld [vmem:[%s10 + $0x18] sm:$0xff]
        %v1274 = vld [vmem:[%s10 + $0x20] sm:$0xff]
        %v1275 = vld [vmem:[%s10 + $0x28] sm:$0xff]
        %v1276 = vld [vmem:[%s10 + $0x30] sm:$0xff]
        %v1277 = vld [vmem:[%s10 + $0x38] sm:$0xff]
        %v1278 = vld [vmem:[%s10 + $0x40] sm:$0xff]
        %v1279 = vld [vmem:[%s10 + $0x48] sm:$0xff]
        %v1280 = vld [vmem:[%s10 + $0x50] sm:$0xff]
        %v1281 = vld [vmem:[%s10 + $0x58] sm:$0xff]
        %v1282 = vld [vmem:[%s10 + $0x60] sm:$0xff]
        %v1283 = vld [vmem:[%s10 + $0x68] sm:$0xff]
        %v1284 = vld [vmem:[%s10 + $0x70] sm:$0xff]
        %v1285 = vld [vmem:[%s10 + $0x78] sm:$0xff]
        %1286 = vmatprep.subr.mxu0 0.0
        %1287 = vmatpush1.msra.mxu0 %v1270
        %1288 = vmatprep.subr.mxu0 0.0
        %1289 = vmatpush1.msra.mxu0 %v1271
        %1290 = vmatprep.subr.mxu0 0.0
        %1291 = vmatpush1.msra.mxu0 %v1272
        %1292 = vmatprep.subr.mxu0 0.0
        %1293 = vmatpush1.msra.mxu0 %v1273
        %1294 = vmatprep.subr.mxu0 0.0
        %1295 = vmatpush1.msra.mxu0 %v1274
        %1296 = vmatprep.subr.mxu0 0.0
        %1297 = vmatpush1.msra.mxu0 %v1275
        %1298 = vmatprep.subr.mxu0 0.0
        %1299 = vmatpush1.msra.mxu0 %v1276
        %1300 = vmatprep.subr.mxu0 0.0
        %1301 = vmatpush1.msra.mxu0 %v1277
        %1302 = vmatprep.subr.mxu0 0.0
        %1303 = vmatpush1.msra.mxu0 %v1278
        %1304 = vmatprep.subr.mxu0 0.0
        %1305 = vmatpush1.msra.mxu0 %v1279
        %1306 = vmatprep.subr.mxu0 0.0
        %1307 = vmatpush1.msra.mxu0 %v1280
        %1308 = vmatprep.subr.mxu0 0.0
        %1309 = vmatpush1.msra.mxu0 %v1281
        %1310 = vmatprep.subr.mxu0 0.0
        %1311 = vmatpush1.msra.mxu0 %v1282
        %1312 = vmatprep.subr.mxu0 0.0
        %1313 = vmatpush1.msra.mxu0 %v1283
        %1314 = vmatprep.subr.mxu0 0.0
        %1315 = vmatpush1.msra.mxu0 %v1284
        %1316 = vmatprep.subr.mxu0 0.0
        %1317 = vmatpush1.msra.mxu0 %v1285
        %1318 = vmatprep.subr.mxu0 0.0
        %1319 = vmatpush1.msra.mxu0 0.0
        %1320 = vmatprep.subr.mxu0 0.0
        %1321 = vmatpush1.msra.mxu0 0.0
        %1322 = vmatprep.subr.mxu0 0.0
        %1323 = vmatpush1.msra.mxu0 0.0
        %1324 = vmatprep.subr.mxu0 0.0
        %1325 = vmatpush1.msra.mxu0 0.0
        %1326 = vmatprep.subr.mxu0 0.0
        %1327 = vmatpush1.msra.mxu0 0.0
        %1328 = vmatprep.subr.mxu0 0.0
        %1329 = vmatpush1.msra.mxu0 0.0
        %1330 = vmatprep.subr.mxu0 0.0
        %1331 = vmatpush1.msra.mxu0 0.0
        %1332 = vmatprep.subr.mxu0 0.0
        %1333 = vmatpush1.msra.mxu0 0.0
        %1334 = vmatprep.subr.mxu0 0.0
        %1335 = vmatpush1.msra.mxu0 0.0
        %1336 = vmatprep.subr.mxu0 0.0
        %1337 = vmatpush1.msra.mxu0 0.0
        %1338 = vmatprep.subr.mxu0 0.0
        %1339 = vmatpush1.msra.mxu0 0.0
        %1340 = vmatprep.subr.mxu0 0.0
        %1341 = vmatpush1.msra.mxu0 0.0
        %1342 = vmatprep.subr.mxu0 0.0
        %1343 = vmatpush1.msra.mxu0 0.0
        %1344 = vmatprep.subr.mxu0 0.0
        %1345 = vmatpush1.msra.mxu0 0.0
        %1346 = vmatprep.subr.mxu0 0.0
        %1347 = vmatpush1.msra.mxu0 0.0
        %1348 = vmatprep.subr.mxu0 0.0
        %1349 = vmatpush1.msra.mxu0 0.0
        %1350 = vmatprep.mubr.f32.mxu0 0.0
        %1351 = vmatmul.mubr.f32.gmra.mrb[0].mxu0 %v1260
        %v1352 = vpop.f32.mrb[0].mxu0
        %v1353 = vadd.f32 0.0, %v1352
        %v1354 = vpop.f32.mrb[0].mxu0
        %1355 = vdwg.mxu0
        %1356 = vmatprep.subr.mxu0 0.0
        %1357 = vmatpush1.msra.mxu0 %v1270
        %1358 = vmatprep.subr.mxu0 0.0
        %1359 = vmatpush1.msra.mxu0 %v1271
        %1360 = vmatprep.subr.mxu0 0.0
        %1361 = vmatpush1.msra.mxu0 %v1272
        %1362 = vmatprep.subr.mxu0 0.0
        %1363 = vmatpush1.msra.mxu0 %v1273
        %1364 = vmatprep.subr.mxu0 0.0
        %1365 = vmatpush1.msra.mxu0 %v1274
        %1366 = vmatprep.subr.mxu0 0.0
        %1367 = vmatpush1.msra.mxu0 %v1275
        %1368 = vmatprep.subr.mxu0 0.0
        %1369 = vmatpush1.msra.mxu0 %v1276
        %1370 = vmatprep.subr.mxu0 0.0
        %1371 = vmatpush1.msra.mxu0 %v1277
        %1372 = vmatprep.subr.mxu0 0.0
        %1373 = vmatpush1.msra.mxu0 %v1278
        %1374 = vmatprep.subr.mxu0 0.0
        %1375 = vmatpush1.msra.mxu0 %v1279
        %1376 = vmatprep.subr.mxu0 0.0
        %1377 = vmatpush1.msra.mxu0 %v1280
        %1378 = vmatprep.subr.mxu0 0.0
        %1379 = vmatpush1.msra.mxu0 %v1281
        %1380 = vmatprep.subr.mxu0 0.0
        %1381 = vmatpush1.msra.mxu0 %v1282
        %1382 = vmatprep.subr.mxu0 0.0
        %1383 = vmatpush1.msra.mxu0 %v1283
        %1384 = vmatprep.subr.mxu0 0.0
        %1385 = vmatpush1.msra.mxu0 %v1284
        %1386 = vmatprep.subr.mxu0 0.0
        %1387 = vmatpush1.msra.mxu0 %v1285
        %1388 = vmatprep.subr.mxu0 0.0
        %1389 = vmatpush1.msra.mxu0 0.0
        %1390 = vmatprep.subr.mxu0 0.0
        %1391 = vmatpush1.msra.mxu0 0.0
        %1392 = vmatprep.subr.mxu0 0.0
        %1393 = vmatpush1.msra.mxu0 0.0
        %1394 = vmatprep.subr.mxu0 0.0
        %1395 = vmatpush1.msra.mxu0 0.0
        %1396 = vmatprep.subr.mxu0 0.0
        %1397 = vmatpush1.msra.mxu0 0.0
        %1398 = vmatprep.subr.mxu0 0.0
        %1399 = vmatpush1.msra.mxu0 0.0
        %1400 = vmatprep.subr.mxu0 0.0
        %1401 = vmatpush1.msra.mxu0 0.0
        %1402 = vmatprep.subr.mxu0 0.0
        %1403 = vmatpush1.msra.mxu0 0.0
        %1404 = vmatprep.subr.mxu0 0.0
        %1405 = vmatpush1.msra.mxu0 0.0
        %1406 = vmatprep.subr.mxu0 0.0
        %1407 = vmatpush1.msra.mxu0 0.0
        %1408 = vmatprep.subr.mxu0 0.0
        %1409 = vmatpush1.msra.mxu0 0.0
        %1410 = vmatprep.subr.mxu0 0.0
        %1411 = vmatpush1.msra.mxu0 0.0
        %1412 = vmatprep.subr.mxu0 0.0
        %1413 = vmatpush1.msra.mxu0 0.0
        %1414 = vmatprep.subr.mxu0 0.0
        %1415 = vmatpush1.msra.mxu0 0.0
        %1416 = vmatprep.subr.mxu0 0.0
        %1417 = vmatpush1.msra.mxu0 0.0
        %1418 = vmatprep.subr.mxu0 0.0
        %1419 = vmatpush1.msra.mxu0 0.0
        %1420 = vmatprep.mubr.f32.mxu0 0.0
        %1421 = vmatmul.mubr.f32.gmra.mrb[0].mxu0 %v1269
        %v1422 = vpop.f32.mrb[0].mxu0
        %v1423 = vadd.f32 0.0, %v1422
        %v1424 = vpop.f32.mrb[0].mxu0
        %1425 = vdwg.mxu0
        %v1426 = vmul.f32 %v1353, %v1353
        %v1427 = vsub.f32 %v1423, %v1426
        %v1428 = vmax.f32 %v1427, 0.0
        %v1429 = vadd.f32 %v1428, 1e-05
        %v1430 = vrsqrt.pop %v1429
        %v1431 = vld [vmem:[%s11] sm:$0xf]
        %v1433 = vsel %vm769, %v1353, 0
        %v1436 = vsel %vm773, %v1431, 0
        %1438 = vmatprep.subr.mxu0 0.0
        %1439 = vmatpush1.msra.mxu0 %v1436
        %1440 = vmatprep.subr.mxu0 0.0
        %1441 = vmatpush1.msra.mxu0 0.0
        %1442 = vmatprep.subr.mxu0 0.0
        %1443 = vmatpush1.msra.mxu0 0.0
        %1444 = vmatprep.subr.mxu0 0.0
        %1445 = vmatpush1.msra.mxu0 0.0
        %1446 = vmatprep.subr.mxu0 0.0
        %1447 = vmatpush1.msra.mxu0 0.0
        %1448 = vmatprep.subr.mxu0 0.0
        %1449 = vmatpush1.msra.mxu0 0.0
        %1450 = vmatprep.subr.mxu0 0.0
        %1451 = vmatpush1.msra.mxu0 0.0
        %1452 = vmatprep.subr.mxu0 0.0
        %1453 = vmatpush1.msra.mxu0 0.0
        %1454 = vmatprep.subr.mxu0 0.0
        %1455 = vmatpush1.msra.mxu0 0.0
        %1456 = vmatprep.subr.mxu0 0.0
        %1457 = vmatpush1.msra.mxu0 0.0
        %1458 = vmatprep.subr.mxu0 0.0
        %1459 = vmatpush1.msra.mxu0 0.0
        %1460 = vmatprep.subr.mxu0 0.0
        %1461 = vmatpush1.msra.mxu0 0.0
        %1462 = vmatprep.subr.mxu0 0.0
        %1463 = vmatpush1.msra.mxu0 0.0
        %1464 = vmatprep.subr.mxu0 0.0
        %1465 = vmatpush1.msra.mxu0 0.0
        %1466 = vmatprep.subr.mxu0 0.0
        %1467 = vmatpush1.msra.mxu0 0.0
        %1468 = vmatprep.subr.mxu0 0.0
        %1469 = vmatpush1.msra.mxu0 0.0
        %1470 = vmatprep.subr.mxu0 0.0
        %1471 = vmatpush1.msra.mxu0 0.0
        %1472 = vmatprep.subr.mxu0 0.0
        %1473 = vmatpush1.msra.mxu0 0.0
        %1474 = vmatprep.subr.mxu0 0.0
        %1475 = vmatpush1.msra.mxu0 0.0
        %1476 = vmatprep.subr.mxu0 0.0
        %1477 = vmatpush1.msra.mxu0 0.0
        %1478 = vmatprep.subr.mxu0 0.0
        %1479 = vmatpush1.msra.mxu0 0.0
        %1480 = vmatprep.subr.mxu0 0.0
        %1481 = vmatpush1.msra.mxu0 0.0
        %1482 = vmatprep.subr.mxu0 0.0
        %1483 = vmatpush1.msra.mxu0 0.0
        %1484 = vmatprep.subr.mxu0 0.0
        %1485 = vmatpush1.msra.mxu0 0.0
        %1486 = vmatprep.subr.mxu0 0.0
        %1487 = vmatpush1.msra.mxu0 0.0
        %1488 = vmatprep.subr.mxu0 0.0
        %1489 = vmatpush1.msra.mxu0 0.0
        %1490 = vmatprep.subr.mxu0 0.0
        %1491 = vmatpush1.msra.mxu0 0.0
        %1492 = vmatprep.subr.mxu0 0.0
        %1493 = vmatpush1.msra.mxu0 0.0
        %1494 = vmatprep.subr.mxu0 0.0
        %1495 = vmatpush1.msra.mxu0 0.0
        %1496 = vmatprep.subr.mxu0 0.0
        %1497 = vmatpush1.msra.mxu0 0.0
        %1498 = vmatprep.subr.mxu0 0.0
        %1499 = vmatpush1.msra.mxu0 0.0
        %1500 = vmatprep.subr.mxu0 0.0
        %1501 = vmatpush1.msra.mxu0 0.0
        %1502 = vmatprep.mubr.f32.mxu0 0.0
        %1503 = vmatmul.mubr.f32.gmra.mrb[0].mxu0 %v1433
        %v1504 = vpop.f32.mrb[0].mxu0
        %v1505 = vadd.f32 0.0, %v1504
        %v1506 = vpop.f32.mrb[0].mxu0
        %1507 = vdwg.mxu0
        %v1509 = vsel %vm769, %v1430, 0
        %1511 = vmatprep.subr.mxu0 0.0
        %1512 = vmatpush1.msra.mxu0 %v1436
        %1513 = vmatprep.subr.mxu0 0.0
        %1514 = vmatpush1.msra.mxu0 0.0
        %1515 = vmatprep.subr.mxu0 0.0
        %1516 = vmatpush1.msra.mxu0 0.0
        %1517 = vmatprep.subr.mxu0 0.0
        %1518 = vmatpush1.msra.mxu0 0.0
        %1519 = vmatprep.subr.mxu0 0.0
        %1520 = vmatpush1.msra.mxu0 0.0
        %1521 = vmatprep.subr.mxu0 0.0
        %1522 = vmatpush1.msra.mxu0 0.0
        %1523 = vmatprep.subr.mxu0 0.0
        %1524 = vmatpush1.msra.mxu0 0.0
        %1525 = vmatprep.subr.mxu0 0.0
        %1526 = vmatpush1.msra.mxu0 0.0
        %1527 = vmatprep.subr.mxu0 0.0
        %1528 = vmatpush1.msra.mxu0 0.0
        %1529 = vmatprep.subr.mxu0 0.0
        %1530 = vmatpush1.msra.mxu0 0.0
        %1531 = vmatprep.subr.mxu0 0.0
        %1532 = vmatpush1.msra.mxu0 0.0
        %1533 = vmatprep.subr.mxu0 0.0
        %1534 = vmatpush1.msra.mxu0 0.0
        %1535 = vmatprep.subr.mxu0 0.0
        %1536 = vmatpush1.msra.mxu0 0.0
        %1537 = vmatprep.subr.mxu0 0.0
        %1538 = vmatpush1.msra.mxu0 0.0
        %1539 = vmatprep.subr.mxu0 0.0
        %1540 = vmatpush1.msra.mxu0 0.0
        %1541 = vmatprep.subr.mxu0 0.0
        %1542 = vmatpush1.msra.mxu0 0.0
        %1543 = vmatprep.subr.mxu0 0.0
        %1544 = vmatpush1.msra.mxu0 0.0
        %1545 = vmatprep.subr.mxu0 0.0
        %1546 = vmatpush1.msra.mxu0 0.0
        %1547 = vmatprep.subr.mxu0 0.0
        %1548 = vmatpush1.msra.mxu0 0.0
        %1549 = vmatprep.subr.mxu0 0.0
        %1550 = vmatpush1.msra.mxu0 0.0
        %1551 = vmatprep.subr.mxu0 0.0
        %1552 = vmatpush1.msra.mxu0 0.0
        %1553 = vmatprep.subr.mxu0 0.0
        %1554 = vmatpush1.msra.mxu0 0.0
        %1555 = vmatprep.subr.mxu0 0.0
        %1556 = vmatpush1.msra.mxu0 0.0
        %1557 = vmatprep.subr.mxu0 0.0
        %1558 = vmatpush1.msra.mxu0 0.0
        %1559 = vmatprep.subr.mxu0 0.0
        %1560 = vmatpush1.msra.mxu0 0.0
        %1561 = vmatprep.subr.mxu0 0.0
        %1562 = vmatpush1.msra.mxu0 0.0
        %1563 = vmatprep.subr.mxu0 0.0
        %1564 = vmatpush1.msra.mxu0 0.0
        %1565 = vmatprep.subr.mxu0 0.0
        %1566 = vmatpush1.msra.mxu0 0.0
        %1567 = vmatprep.subr.mxu0 0.0
        %1568 = vmatpush1.msra.mxu0 0.0
        %1569 = vmatprep.subr.mxu0 0.0
        %1570 = vmatpush1.msra.mxu0 0.0
        %1571 = vmatprep.subr.mxu0 0.0
        %1572 = vmatpush1.msra.mxu0 0.0
        %1573 = vmatprep.subr.mxu0 0.0
        %1574 = vmatpush1.msra.mxu0 0.0
        %1575 = vmatprep.mubr.f32.mxu0 0.0
        %1576 = vmatmul.mubr.f32.gmra.mrb[0].mxu0 %v1509
        %v1577 = vpop.f32.mrb[0].mxu0
        %v1578 = vadd.f32 0.0, %v1577
        %v1579 = vpop.f32.mrb[0].mxu0
        %1580 = vdwg.mxu0
        %v1581 = vmul.f32 %v1252, %v1578
        %v1582 = vmul.f32 %v1505, %v1581
        %v1583 = vsub.f32 %v1253, %v1582
        %v1585 = vlaneseq
        %v1586 = vshrl.u32 %v1585, 7
        %v1587 = vsub.s32 0, %v1586
        %v1588 = vrot.slane %v1581, %v1587
        %v1590 = vmul.f32 %v1250, %v1588
        %v1591 = vmul.f32 %v1251, %v1588
        %v1593 = vlaneseq
        %v1594 = vshrl.u32 %v1593, 7
        %v1595 = vsub.s32 0, %v1594
        %v1596 = vrot.slane %v1583, %v1595
        %v1598 = vadd.f32 %v1590, %v1596
        %v1599 = vadd.f32 %v1591, %v1596
        %v1600 = vxor.u32 %v1598, 2147483648
        %v1601 = vxor.u32 %v1599, 2147483648
        %v1602 = vmul.f32 %v1600, 1.442695
        %v1603 = vpow.pop %v1602
        %v1604 = vmul.f32 %v1601, 1.442695
        %v1605 = vpow.pop %v1604
        %v1606 = vadd.f32 %v1603, 1.0
        %v1607 = vadd.f32 %v1605, 1.0
        %v1608 = vrcp.pop %v1606
        %v1609 = vmul.f32 1.0, %v1608
        %v1610 = vrcp.pop %v1607
        %v1611 = vmul.f32 1.0, %v1610
        %v1612 = vmul.f32 %v1598, %v1609
        %v1613 = vmul.f32 %v1599, %v1611
        %1614 = vst [vmem:[#allocation3] sm:$0x1] 0.0
        %1615 = vst [vmem:[#allocation3 + $0x11] sm:$0x1] 0.0
        %1616 = vst [vmem:[#allocation3 + $0x1] sm:$0xff] %v1612
        %1617 = vst [vmem:[#allocation3 + $0x9] sm:$0xff] %v1613
        %v1618 = vld [vmem:[#allocation3] sm:$0xff]
        %v1619 = vld [vmem:[#allocation3 + $0x8] sm:$0xff]
        %v1620 = vld [vmem:[#allocation7] sm:$0xff]
        %v1621 = vld [vmem:[#allocation7 + $0x8] sm:$0xff]
        %v1622 = vld [vmem:[#allocation7 + $0x10] sm:$0xff]
        %v1623 = vld [vmem:[#allocation7 + $0x18] sm:$0xff]
        %v1624 = vld [vmem:[#allocation7 + $0x20] sm:$0xff]
        %v1625 = vld [vmem:[#allocation7 + $0x28] sm:$0xff]
        %v1626 = vld [vmem:[#allocation7 + $0x30] sm:$0xff]
        %v1627 = vld [vmem:[#allocation7 + $0x38] sm:$0xff]
        %v1628 = vld [vmem:[#allocation7 + $0x40] sm:$0xff]
        %v1629 = vld [vmem:[#allocation7 + $0x48] sm:$0xff]
        %v1630 = vld [vmem:[#allocation7 + $0x50] sm:$0xff]
        %v1631 = vld [vmem:[#allocation7 + $0x58] sm:$0xff]
        %v1632 = vld [vmem:[#allocation7 + $0x60] sm:$0xff]
        %v1633 = vld [vmem:[#allocation7 + $0x68] sm:$0xff]
        %v1634 = vld [vmem:[#allocation7 + $0x70] sm:$0xff]
        %v1635 = vld [vmem:[#allocation7 + $0x78] sm:$0xff]
        %v1636 = vld [vmem:[#allocation3 + $0x1] sm:$0xff]
        %v1637 = vld [vmem:[#allocation3 + $0x9] sm:$0xff]
        %s1638 = scalar_lea.vmem [#allocation7], 128
        %v1639 = vld [vmem:[%s1638] sm:$0xff]
        %v1640 = vld [vmem:[%s1638 + $0x8] sm:$0xff]
        %v1641 = vld [vmem:[%s1638 + $0x10] sm:$0xff]
        %v1642 = vld [vmem:[%s1638 + $0x18] sm:$0xff]
        %v1643 = vld [vmem:[%s1638 + $0x20] sm:$0xff]
        %v1644 = vld [vmem:[%s1638 + $0x28] sm:$0xff]
        %v1645 = vld [vmem:[%s1638 + $0x30] sm:$0xff]
        %v1646 = vld [vmem:[%s1638 + $0x38] sm:$0xff]
        %v1647 = vld [vmem:[%s1638 + $0x40] sm:$0xff]
        %v1648 = vld [vmem:[%s1638 + $0x48] sm:$0xff]
        %v1649 = vld [vmem:[%s1638 + $0x50] sm:$0xff]
        %v1650 = vld [vmem:[%s1638 + $0x58] sm:$0xff]
        %v1651 = vld [vmem:[%s1638 + $0x60] sm:$0xff]
        %v1652 = vld [vmem:[%s1638 + $0x68] sm:$0xff]
        %v1653 = vld [vmem:[%s1638 + $0x70] sm:$0xff]
        %v1654 = vld [vmem:[%s1638 + $0x78] sm:$0xff]
        %1655 = vmatprep.subr.mxu0 0.0
        %1656 = vmatpush1.msra.mxu0 %v1639
        %1657 = vmatprep.subr.mxu0 0.0
        %1658 = vmatpush1.msra.mxu0 %v1640
        %1659 = vmatprep.subr.mxu0 0.0
        %1660 = vmatpush1.msra.mxu0 %v1641
        %1661 = vmatprep.subr.mxu0 0.0
        %1662 = vmatpush1.msra.mxu0 %v1642
        %1663 = vmatprep.subr.mxu0 0.0
        %1664 = vmatpush1.msra.mxu0 %v1643
        %1665 = vmatprep.subr.mxu0 0.0
        %1666 = vmatpush1.msra.mxu0 %v1644
        %1667 = vmatprep.subr.mxu0 0.0
        %1668 = vmatpush1.msra.mxu0 %v1645
        %1669 = vmatprep.subr.mxu0 0.0
        %1670 = vmatpush1.msra.mxu0 %v1646
        %1671 = vmatprep.subr.mxu0 0.0
        %1672 = vmatpush1.msra.mxu0 %v1647
        %1673 = vmatprep.subr.mxu0 0.0
        %1674 = vmatpush1.msra.mxu0 %v1648
        %1675 = vmatprep.subr.mxu0 0.0
        %1676 = vmatpush1.msra.mxu0 %v1649
        %1677 = vmatprep.subr.mxu0 0.0
        %1678 = vmatpush1.msra.mxu0 %v1650
        %1679 = vmatprep.subr.mxu0 0.0
        %1680 = vmatpush1.msra.mxu0 %v1651
        %1681 = vmatprep.subr.mxu0 0.0
        %1682 = vmatpush1.msra.mxu0 %v1652
        %1683 = vmatprep.subr.mxu0 0.0
        %1684 = vmatpush1.msra.mxu0 %v1653
        %1685 = vmatprep.subr.mxu0 0.0
        %1686 = vmatpush1.msra.mxu0 %v1654
        %1687 = vmatprep.subr.mxu0 0.0
        %1688 = vmatpush1.msra.mxu0 0.0
        %1689 = vmatprep.subr.mxu0 0.0
        %1690 = vmatpush1.msra.mxu0 0.0
        %1691 = vmatprep.subr.mxu0 0.0
        %1692 = vmatpush1.msra.mxu0 0.0
        %1693 = vmatprep.subr.mxu0 0.0
        %1694 = vmatpush1.msra.mxu0 0.0
        %1695 = vmatprep.subr.mxu0 0.0
        %1696 = vmatpush1.msra.mxu0 0.0
        %1697 = vmatprep.subr.mxu0 0.0
        %1698 = vmatpush1.msra.mxu0 0.0
        %1699 = vmatprep.subr.mxu0 0.0
        %1700 = vmatpush1.msra.mxu0 0.0
        %1701 = vmatprep.subr.mxu0 0.0
        %1702 = vmatpush1.msra.mxu0 0.0
        %1703 = vmatprep.subr.mxu0 0.0
        %1704 = vmatpush1.msra.mxu0 0.0
        %1705 = vmatprep.subr.mxu0 0.0
        %1706 = vmatpush1.msra.mxu0 0.0
        %1707 = vmatprep.subr.mxu0 0.0
        %1708 = vmatpush1.msra.mxu0 0.0
        %1709 = vmatprep.subr.mxu0 0.0
        %1710 = vmatpush1.msra.mxu0 0.0
        %1711 = vmatprep.subr.mxu0 0.0
        %1712 = vmatpush1.msra.mxu0 0.0
        %1713 = vmatprep.subr.mxu0 0.0
        %1714 = vmatpush1.msra.mxu0 0.0
        %1715 = vmatprep.subr.mxu0 0.0
        %1716 = vmatpush1.msra.mxu0 0.0
        %1717 = vmatprep.subr.mxu0 0.0
        %1718 = vmatpush1.msra.mxu0 0.0
        %1719 = vmatprep.mubr.f32.mxu0 0.0
        %1720 = vmatmul.mubr.f32.gmra.mrb[0].mxu0 %v1636
        %v1721 = vpop.f32.mrb[0].mxu0
        %v1722 = vadd.f32 0.0, %v1721
        %v1723 = vpop.f32.mrb[0].mxu0
        %1724 = vmatprep.mubr.f32.mxu0 0.0
        %1725 = vmatmul.mubr.f32.gmra.mrb[0].mxu0 %v1637
        %v1726 = vpop.f32.mrb[0].mxu0
        %v1727 = vadd.f32 0.0, %v1726
        %v1728 = vpop.f32.mrb[0].mxu0
        %1729 = vdwg.mxu0
        %1730 = vmatprep.subr.mxu0 0.0
        %1731 = vmatpush1.msra.mxu0 %v1620
        %1732 = vmatprep.subr.mxu0 0.0
        %1733 = vmatpush1.msra.mxu0 %v1621
        %1734 = vmatprep.subr.mxu0 0.0
        %1735 = vmatpush1.msra.mxu0 %v1622
        %1736 = vmatprep.subr.mxu0 0.0
        %1737 = vmatpush1.msra.mxu0 %v1623
        %1738 = vmatprep.subr.mxu0 0.0
        %1739 = vmatpush1.msra.mxu0 %v1624
        %1740 = vmatprep.subr.mxu0 0.0
        %1741 = vmatpush1.msra.mxu0 %v1625
        %1742 = vmatprep.subr.mxu0 0.0
        %1743 = vmatpush1.msra.mxu0 %v1626
        %1744 = vmatprep.subr.mxu0 0.0
        %1745 = vmatpush1.msra.mxu0 %v1627
        %1746 = vmatprep.subr.mxu0 0.0
        %1747 = vmatpush1.msra.mxu0 %v1628
        %1748 = vmatprep.subr.mxu0 0.0
        %1749 = vmatpush1.msra.mxu0 %v1629
        %1750 = vmatprep.subr.mxu0 0.0
        %1751 = vmatpush1.msra.mxu0 %v1630
        %1752 = vmatprep.subr.mxu0 0.0
        %1753 = vmatpush1.msra.mxu0 %v1631
        %1754 = vmatprep.subr.mxu0 0.0
        %1755 = vmatpush1.msra.mxu0 %v1632
        %1756 = vmatprep.subr.mxu0 0.0
        %1757 = vmatpush1.msra.mxu0 %v1633
        %1758 = vmatprep.subr.mxu0 0.0
        %1759 = vmatpush1.msra.mxu0 %v1634
        %1760 = vmatprep.subr.mxu0 0.0
        %1761 = vmatpush1.msra.mxu0 %v1635
        %1762 = vmatprep.subr.mxu0 0.0
        %1763 = vmatpush1.msra.mxu0 0.0
        %1764 = vmatprep.subr.mxu0 0.0
        %1765 = vmatpush1.msra.mxu0 0.0
        %1766 = vmatprep.subr.mxu0 0.0
        %1767 = vmatpush1.msra.mxu0 0.0
        %1768 = vmatprep.subr.mxu0 0.0
        %1769 = vmatpush1.msra.mxu0 0.0
        %1770 = vmatprep.subr.mxu0 0.0
        %1771 = vmatpush1.msra.mxu0 0.0
        %1772 = vmatprep.subr.mxu0 0.0
        %1773 = vmatpush1.msra.mxu0 0.0
        %1774 = vmatprep.subr.mxu0 0.0
        %1775 = vmatpush1.msra.mxu0 0.0
        %1776 = vmatprep.subr.mxu0 0.0
        %1777 = vmatpush1.msra.mxu0 0.0
        %1778 = vmatprep.subr.mxu0 0.0
        %1779 = vmatpush1.msra.mxu0 0.0
        %1780 = vmatprep.subr.mxu0 0.0
        %1781 = vmatpush1.msra.mxu0 0.0
        %1782 = vmatprep.subr.mxu0 0.0
        %1783 = vmatpush1.msra.mxu0 0.0
        %1784 = vmatprep.subr.mxu0 0.0
        %1785 = vmatpush1.msra.mxu0 0.0
        %1786 = vmatprep.subr.mxu0 0.0
        %1787 = vmatpush1.msra.mxu0 0.0
        %1788 = vmatprep.subr.mxu0 0.0
        %1789 = vmatpush1.msra.mxu0 0.0
        %1790 = vmatprep.subr.mxu0 0.0
        %1791 = vmatpush1.msra.mxu0 0.0
        %1792 = vmatprep.subr.mxu0 0.0
        %1793 = vmatpush1.msra.mxu0 0.0
        %1794 = vmatprep.mubr.f32.mxu0 0.0
        %1795 = vmatmul.mubr.f32.gmra.mrb[0].mxu0 %v1618
        %v1796 = vpop.f32.mrb[0].mxu0
        %v1797 = vadd.f32 %v1722, %v1796
        %v1798 = vpop.f32.mrb[0].mxu0
        %1799 = vmatprep.mubr.f32.mxu0 0.0
        %1800 = vmatmul.mubr.f32.gmra.mrb[0].mxu0 %v1619
        %v1801 = vpop.f32.mrb[0].mxu0
        %v1802 = vadd.f32 %v1727, %v1801
        %v1803 = vpop.f32.mrb[0].mxu0
        %1804 = vdwg.mxu0
        %v1805 = vld [vmem:[#allocation3 + $0x2] sm:$0xff]
        %v1806 = vld [vmem:[#allocation3 + $0xa] sm:$0xff]
        %s1807 = scalar_lea.vmem [#allocation7], 256
        %v1808 = vld [vmem:[%s1807] sm:$0xff]
        %v1809 = vld [vmem:[%s1807 + $0x8] sm:$0xff]
        %v1810 = vld [vmem:[%s1807 + $0x10] sm:$0xff]
        %v1811 = vld [vmem:[%s1807 + $0x18] sm:$0xff]
        %v1812 = vld [vmem:[%s1807 + $0x20] sm:$0xff]
        %v1813 = vld [vmem:[%s1807 + $0x28] sm:$0xff]
        %v1814 = vld [vmem:[%s1807 + $0x30] sm:$0xff]
        %v1815 = vld [vmem:[%s1807 + $0x38] sm:$0xff]
        %v1816 = vld [vmem:[%s1807 + $0x40] sm:$0xff]
        %v1817 = vld [vmem:[%s1807 + $0x48] sm:$0xff]
        %v1818 = vld [vmem:[%s1807 + $0x50] sm:$0xff]
        %v1819 = vld [vmem:[%s1807 + $0x58] sm:$0xff]
        %v1820 = vld [vmem:[%s1807 + $0x60] sm:$0xff]
        %v1821 = vld [vmem:[%s1807 + $0x68] sm:$0xff]
        %v1822 = vld [vmem:[%s1807 + $0x70] sm:$0xff]
        %v1823 = vld [vmem:[%s1807 + $0x78] sm:$0xff]
        %1824 = vmatprep.subr.mxu0 0.0
        %1825 = vmatpush1.msra.mxu0 %v1808
        %1826 = vmatprep.subr.mxu0 0.0
        %1827 = vmatpush1.msra.mxu0 %v1809
        %1828 = vmatprep.subr.mxu0 0.0
        %1829 = vmatpush1.msra.mxu0 %v1810
        %1830 = vmatprep.subr.mxu0 0.0
        %1831 = vmatpush1.msra.mxu0 %v1811
        %1832 = vmatprep.subr.mxu0 0.0
        %1833 = vmatpush1.msra.mxu0 %v1812
        %1834 = vmatprep.subr.mxu0 0.0
        %1835 = vmatpush1.msra.mxu0 %v1813
        %1836 = vmatprep.subr.mxu0 0.0
        %1837 = vmatpush1.msra.mxu0 %v1814
        %1838 = vmatprep.subr.mxu0 0.0
        %1839 = vmatpush1.msra.mxu0 %v1815
        %1840 = vmatprep.subr.mxu0 0.0
        %1841 = vmatpush1.msra.mxu0 %v1816
        %1842 = vmatprep.subr.mxu0 0.0
        %1843 = vmatpush1.msra.mxu0 %v1817
        %1844 = vmatprep.subr.mxu0 0.0
        %1845 = vmatpush1.msra.mxu0 %v1818
        %1846 = vmatprep.subr.mxu0 0.0
        %1847 = vmatpush1.msra.mxu0 %v1819
        %1848 = vmatprep.subr.mxu0 0.0
        %1849 = vmatpush1.msra.mxu0 %v1820
        %1850 = vmatprep.subr.mxu0 0.0
        %1851 = vmatpush1.msra.mxu0 %v1821
        %1852 = vmatprep.subr.mxu0 0.0
        %1853 = vmatpush1.msra.mxu0 %v1822
        %1854 = vmatprep.subr.mxu0 0.0
        %1855 = vmatpush1.msra.mxu0 %v1823
        %1856 = vmatprep.subr.mxu0 0.0
        %1857 = vmatpush1.msra.mxu0 0.0
        %1858 = vmatprep.subr.mxu0 0.0
        %1859 = vmatpush1.msra.mxu0 0.0
        %1860 = vmatprep.subr.mxu0 0.0
        %1861 = vmatpush1.msra.mxu0 0.0
        %1862 = vmatprep.subr.mxu0 0.0
        %1863 = vmatpush1.msra.mxu0 0.0
        %1864 = vmatprep.subr.mxu0 0.0
        %1865 = vmatpush1.msra.mxu0 0.0
        %1866 = vmatprep.subr.mxu0 0.0
        %1867 = vmatpush1.msra.mxu0 0.0
        %1868 = vmatprep.subr.mxu0 0.0
        %1869 = vmatpush1.msra.mxu0 0.0
        %1870 = vmatprep.subr.mxu0 0.0
        %1871 = vmatpush1.msra.mxu0 0.0
        %1872 = vmatprep.subr.mxu0 0.0
        %1873 = vmatpush1.msra.mxu0 0.0
        %1874 = vmatprep.subr.mxu0 0.0
        %1875 = vmatpush1.msra.mxu0 0.0
        %1876 = vmatprep.subr.mxu0 0.0
        %1877 = vmatpush1.msra.mxu0 0.0
        %1878 = vmatprep.subr.mxu0 0.0
        %1879 = vmatpush1.msra.mxu0 0.0
        %1880 = vmatprep.subr.mxu0 0.0
        %1881 = vmatpush1.msra.mxu0 0.0
        %1882 = vmatprep.subr.mxu0 0.0
        %1883 = vmatpush1.msra.mxu0 0.0
        %1884 = vmatprep.subr.mxu0 0.0
        %1885 = vmatpush1.msra.mxu0 0.0
        %1886 = vmatprep.subr.mxu0 0.0
        %1887 = vmatpush1.msra.mxu0 0.0
        %1888 = vmatprep.mubr.f32.mxu0 0.0
        %1889 = vmatmul.mubr.f32.gmra.mrb[0].mxu0 %v1805
        %v1890 = vpop.f32.mrb[0].mxu0
        %v1891 = vadd.f32 0.0, %v1890
        %v1892 = vpop.f32.mrb[0].mxu0
        %1893 = vmatprep.mubr.f32.mxu0 0.0
        %1894 = vmatmul.mubr.f32.gmra.mrb[0].mxu0 %v1806
        %v1895 = vpop.f32.mrb[0].mxu0
        %v1896 = vadd.f32 0.0, %v1895
        %v1897 = vpop.f32.mrb[0].mxu0
        %1898 = vdwg.mxu0
        %v1899 = vadd.f32 %v1797, %v1891
        %v1900 = vadd.f32 %v1802, %v1896
        %v1901 = vld [vmem:[%s13] sm:$0x1]
        %v1903 = vlaneseq
        %v1904 = vshrl.u32 %v1903, 7
        %v1905 = vsub.s32 0, %v1904
        %v1906 = vrot.slane %v1901, %v1905
        %v1908 = vadd.f32 %v1899, %v1906
        %v1909 = vadd.f32 %v1900, %v1906
        %v1910 = vld [vmem:[#allocation9] sm:$0xff]
        %v1911 = vld [vmem:[#allocation9 + $0x8] sm:$0xff]
        %v1912 = vld [vmem:[#allocation9 + $0x10] sm:$0xff]
        %v1913 = vld [vmem:[#allocation9 + $0x18] sm:$0xff]
        %v1914 = vld [vmem:[#allocation9 + $0x20] sm:$0xff]
        %v1915 = vld [vmem:[#allocation9 + $0x28] sm:$0xff]
        %v1916 = vld [vmem:[#allocation9 + $0x30] sm:$0xff]
        %v1917 = vld [vmem:[#allocation9 + $0x38] sm:$0xff]
        %v1918 = vld [vmem:[%s15] sm:$0x1]
        %v1920 = vlaneseq
        %v1921 = vshrl.u32 %v1920, 7
        %v1922 = vsub.s32 0, %v1921
        %v1923 = vrot.slane %v1918, %v1922
        %v1926 = vsel %vm588, %v583, 0
        %v1929 = vsel %vm588, %v584, 0
        %1931 = vmatprep.subr.mxu0 0.0
        %1932 = vmatpush1.msra.mxu0 %v1910
        %1933 = vmatprep.subr.mxu0 0.0
        %1934 = vmatpush1.msra.mxu0 %v1911
        %1935 = vmatprep.subr.mxu0 0.0
        %1936 = vmatpush1.msra.mxu0 %v1912
        %1937 = vmatprep.subr.mxu0 0.0
        %1938 = vmatpush1.msra.mxu0 %v1913
        %1939 = vmatprep.subr.mxu0 0.0
        %1940 = vmatpush1.msra.mxu0 %v1914
        %1941 = vmatprep.subr.mxu0 0.0
        %1942 = vmatpush1.msra.mxu0 %v1915
        %1943 = vmatprep.subr.mxu0 0.0
        %1944 = vmatpush1.msra.mxu0 %v1916
        %1945 = vmatprep.subr.mxu0 0.0
        %1946 = vmatpush1.msra.mxu0 %v1917
        %1947 = vmatprep.subr.mxu0 0.0
        %1948 = vmatpush1.msra.mxu0 0.0
        %1949 = vmatprep.subr.mxu0 0.0
        %1950 = vmatpush1.msra.mxu0 0.0
        %1951 = vmatprep.subr.mxu0 0.0
        %1952 = vmatpush1.msra.mxu0 0.0
        %1953 = vmatprep.subr.mxu0 0.0
        %1954 = vmatpush1.msra.mxu0 0.0
        %1955 = vmatprep.subr.mxu0 0.0
        %1956 = vmatpush1.msra.mxu0 0.0
        %1957 = vmatprep.subr.mxu0 0.0
        %1958 = vmatpush1.msra.mxu0 0.0
        %1959 = vmatprep.subr.mxu0 0.0
        %1960 = vmatpush1.msra.mxu0 0.0
        %1961 = vmatprep.subr.mxu0 0.0
        %1962 = vmatpush1.msra.mxu0 0.0
        %1963 = vmatprep.subr.mxu0 0.0
        %1964 = vmatpush1.msra.mxu0 0.0
        %1965 = vmatprep.subr.mxu0 0.0
        %1966 = vmatpush1.msra.mxu0 0.0
        %1967 = vmatprep.subr.mxu0 0.0
        %1968 = vmatpush1.msra.mxu0 0.0
        %1969 = vmatprep.subr.mxu0 0.0
        %1970 = vmatpush1.msra.mxu0 0.0
        %1971 = vmatprep.subr.mxu0 0.0
        %1972 = vmatpush1.msra.mxu0 0.0
        %1973 = vmatprep.subr.mxu0 0.0
        %1974 = vmatpush1.msra.mxu0 0.0
        %1975 = vmatprep.subr.mxu0 0.0
        %1976 = vmatpush1.msra.mxu0 0.0
        %1977 = vmatprep.subr.mxu0 0.0
        %1978 = vmatpush1.msra.mxu0 0.0
        %1979 = vmatprep.subr.mxu0 0.0
        %1980 = vmatpush1.msra.mxu0 0.0
        %1981 = vmatprep.subr.mxu0 0.0
        %1982 = vmatpush1.msra.mxu0 0.0
        %1983 = vmatprep.subr.mxu0 0.0
        %1984 = vmatpush1.msra.mxu0 0.0
        %1985 = vmatprep.subr.mxu0 0.0
        %1986 = vmatpush1.msra.mxu0 0.0
        %1987 = vmatprep.subr.mxu0 0.0
        %1988 = vmatpush1.msra.mxu0 0.0
        %1989 = vmatprep.subr.mxu0 0.0
        %1990 = vmatpush1.msra.mxu0 0.0
        %1991 = vmatprep.subr.mxu0 0.0
        %1992 = vmatpush1.msra.mxu0 0.0
        %1993 = vmatprep.subr.mxu0 0.0
        %1994 = vmatpush1.msra.mxu0 0.0
        %1995 = vmatprep.mubr.f32.mxu0 0.0
        %1996 = vmatmul.mubr.f32.gmra.mrb[0].mxu0 %v1926
        %v1997 = vpop.f32.mrb[0].mxu0
        %v1998 = vadd.f32 %v1923, %v1997
        %v1999 = vpop.f32.mrb[0].mxu0
        %2000 = vmatprep.mubr.f32.mxu0 0.0
        %2001 = vmatmul.mubr.f32.gmra.mrb[0].mxu0 %v1929
        %v2002 = vpop.f32.mrb[0].mxu0
        %v2003 = vadd.f32 %v1923, %v2002
        %v2004 = vpop.f32.mrb[0].mxu0
        %2005 = vdwg.mxu0
        %v2006 = vadd.f32 %v1908, %v1998
        %v2007 = vadd.f32 %v1909, %v2003
        %2008 = vst [vmem:[%s579] sm:$0xff] %v2006
        %2009 = vst [vmem:[%s579 + $0x8] sm:$0xff] %v2007
        %s2010 = sand.u32 %s388, 1
        %s2011 = scalar_lea.sflag [#allocation6], %s2010
        %s2012 = sand.u32 %s388, 1
        %s2013 = smul.addr %s2012, 16
        %s2014 = scalar_lea.vmem [#allocation10], %s2013
        // Predicated region
        $region97: #{tpu_custom_call.1} parent=83 // pred_check
          %p2015 = pneg %p398
        $region98: #{tpu_custom_call.1} parent=83 // pred_check_branch
          %2017 = sbr.rel (%p2015) target = $region100
        $region99: #{tpu_custom_call.1} parent=83 // pred_region
          %s2019 = ssub.s32 256, 256
          %2020 = vsyncadd %s2011, %s2019
          %s2021 = smul.addr %s34, 2
          %s2022 = smul.addr %s2021, 128
          %s2023 = scalar_lea.hbm %s16, %s2022
          %s2024 = sshll.u32 %s2014, 4
          %s2025 = int_to_ptr.vmem [resolvable:$true] %s2024
          %2030 = dma.vmem_to_hbm [thread:$0]  %s2025, 256, %s2023, %s2011, 128, 128, 8
        $region100: #{tpu_custom_call.1} parent=83 // pred_fallthru
          _
      $region84: #{tpu_custom_call.1} parent=5 // pred_fallthru
        _
      %p2031 = scmp.le.s32.totalorder 2, %s29
      // Predicated region
      $region101: #{tpu_custom_call.1} parent=5 // pred_check
        %p2032 = pneg %p2031
      $region102: #{tpu_custom_call.1} parent=5 // pred_check_branch
        %2034 = sbr.rel (%p2032) target = $region104
      $region103: #{tpu_custom_call.1} parent=5 // pred_region
        %s2035 = ssub.s32 %s29, 2
        // Predicated region
        $region105: #{tpu_custom_call.1} parent=103 // pred_check
          %p2036 = pneg %p404
        $region106: #{tpu_custom_call.1} parent=103 // pred_check_branch
          %2038 = sbr.rel (%p2036) target = $region108
        $region107: #{tpu_custom_call.1} parent=103 // pred_region
          %s2039 = sand.u32 %s389, 1
          %s2040 = scalar_lea.sflag [#allocation6], %s2039
          %s2041 = sand.u32 %s389, 1
          %s2042 = smul.addr %s2041, 16
          %s2043 = scalar_lea.vmem [#allocation10], %s2042
          %2044 = dma.done %s2040, 256
        $region108: #{tpu_custom_call.1} parent=103 // pred_fallthru
          _
      $region104: #{tpu_custom_call.1} parent=5 // pred_fallthru
        _
    $region6: #{tpu_custom_call.1} parent=1 // loop_footer
      %s33 = sadd.s32 1, %s29
    $region7: #{tpu_custom_call.1} parent=1 // loop_footer_branch
      %28 = sbr.rel target = $region3
    $region8: #{tpu_custom_call.1} parent=1 // loop_exit
      _
    %2045 = vsyncpa [#allocation5], 1
    %s2046 = scalar_lea.sflag [#allocation5], 1
    %2047 = vsyncpa %s2046, 1
    %2048 = vsyncpa [#allocation8], 1
    %2049 = vsyncpa [#allocation6], 1
    %s2050 = scalar_lea.sflag [#allocation6], 1
    %2051 = vsyncpa %s2050, 1

</llo_original>
